<compile_context>
chip_gen: v5e
topology: v5e:2x2
jax: 0.10.0
libtpu: 0.0.40
codegen_flags: <defaults>
</compile_context>

<pallas_src>
import functools
import math

import jax
import jax.numpy as jnp
from jax.experimental import pallas as pl
from jax.experimental.pallas import tpu as pltpu

# ----------------------------- model config (small) -----------------------------
VOCAB = 100
TYPE_VOCAB = 2
MAX_POS = 32
HIDDEN = 32
HEADS = 2
HEAD_DIM = HIDDEN // HEADS
LAYERS = 2
INTERMEDIATE = 64
NUM_CLASS = 3
LN_EPS = 1e-12


def _erf(x):
    # Abramowitz & Stegun 7.1.26 polynomial, max abs error ~1.5e-7.
    # Only uses exp / mul / add / abs / where -> always lowers on Mosaic.
    a1, a2, a3, a4, a5 = 0.254829592, -0.284496736, 1.421413741, -1.453152027, 1.061405429
    p = 0.3275911
    ax = jnp.abs(x)
    t = 1.0 / (1.0 + p * ax)
    poly = ((((a5 * t + a4) * t + a3) * t + a2) * t + a1) * t
    y = 1.0 - poly * jnp.exp(-ax * ax)
    return jnp.where(x >= 0, y, -y)


def _gelu_exact(x):
    # BERT's exact erf-GELU.
    return 0.5 * x * (1.0 + _erf(x * (1.0 / math.sqrt(2.0))))


# ----------------------------- fused Pallas kernel -----------------------------
def _bert_kernel(ids_ref, tt_ref, mask_ref,
                 word_ref, pos_ref, type_ref, eg_ref, eb_ref,
                 wqkv_ref, bqkv_ref, wo_ref, bo_ref,
                 ln1g_ref, ln1b_ref, w1_ref, b1_ref,
                 w2_ref, b2_ref, ln2g_ref, ln2b_ref,
                 pw_ref, pb_ref, cw_ref, cb_ref,
                 out_ref, *, B, S):
    """Single invocation: embeddings + all layers + pooler + classifier in VMEM."""
    f32 = jnp.float32
    T = B * S
    scale = 1.0 / math.sqrt(HEAD_DIM)

    def layer_norm(x, g, b):
        mu = jnp.mean(x, axis=-1, keepdims=True)
        var = jnp.mean((x - mu) ** 2, axis=-1, keepdims=True)
        return (x - mu) * jax.lax.rsqrt(var + LN_EPS) * g + b

    # ---- embeddings folded into the kernel (one-hot matmul gathers) ----
    ids = ids_ref[...]                                                    # [T, 1] int32
    tt = tt_ref[...]                                                      # [T, 1] int32
    word_oh = (jax.lax.broadcasted_iota(jnp.int32, (T, VOCAB), 1) == ids).astype(f32)
    type_oh = (jax.lax.broadcasted_iota(jnp.int32, (T, TYPE_VOCAB), 1) == tt).astype(f32)
    pos_s = pos_ref[0:S, :]                                               # [S, H]
    pos_slab = jnp.concatenate([pos_s] * B, axis=0)                       # [T, H]
    x = (jnp.dot(word_oh, word_ref[...], preferred_element_type=f32)
         + pos_slab
         + jnp.dot(type_oh, type_ref[...], preferred_element_type=f32))   # [T, H]
    x = layer_norm(x, eg_ref[...], eb_ref[...])

    for l in range(LAYERS):                                               # static unroll
        # ---- fused QKV projection over the whole batch slab: [T,H] @ [H,3H] ----
        qkv = jnp.dot(x, wqkv_ref[l], preferred_element_type=f32) + bqkv_ref[l]

        # ---- per-(batch, head) attention; contexts written at static lane/row
        #      offsets, then ONE output-projection matmul over the full slab ----
        ctx_rows = []
        for b in range(B):                                                # static unroll
            r0 = b * S
            mask_b = mask_ref[b:b + 1, :]                                 # [1, S] bias
            head_ctx = []
            for h in range(HEADS):                                        # static unroll
                c0 = h * HEAD_DIM
                q = qkv[r0:r0 + S, c0:c0 + HEAD_DIM]
                k = qkv[r0:r0 + S, HIDDEN + c0:HIDDEN + c0 + HEAD_DIM]
                v = qkv[r0:r0 + S, 2 * HIDDEN + c0:2 * HIDDEN + c0 + HEAD_DIM]
                # q @ k^T without an explicit transpose (contraction on dim 1).
                s = jax.lax.dot_general(q, k, (((1,), (1,)), ((), ())),
                                        preferred_element_type=f32) * scale + mask_b
                s = s - jnp.max(s, axis=-1, keepdims=True)
                p = jnp.exp(s)
                p = p * pl.reciprocal(jnp.sum(p, axis=-1, keepdims=True), approx=True)
                head_ctx.append(jnp.dot(p, v, preferred_element_type=f32))  # [S, Dh]
            ctx_rows.append(jnp.concatenate(head_ctx, axis=1))               # [S, H]
        ctx = jnp.concatenate(ctx_rows, axis=0)                              # [T, H]

        attn_out = jnp.dot(ctx, wo_ref[l], preferred_element_type=f32) + bo_ref[l]

        # ---- residual + LN1 (fused) ----
        x = layer_norm(x + attn_out, ln1g_ref[l], ln1b_ref[l])

        # ---- FFN: gelu(x W1 + b1) W2 + b2, residual + LN2 (fused) ----
        ffn = jnp.dot(x, w1_ref[l], preferred_element_type=f32) + b1_ref[l]
        ffn = _gelu_exact(ffn)
        ffn = jnp.dot(ffn, w2_ref[l], preferred_element_type=f32) + b2_ref[l]
        x = layer_norm(x + ffn, ln2g_ref[l], ln2b_ref[l])

    # ---- pooler (tanh(cls W + b)) + classifier ----
    cls = jnp.concatenate([x[b * S:b * S + 1, :] for b in range(B)], axis=0)   # [B, H]
    pooled = jnp.tanh(jnp.dot(cls, pw_ref[...], preferred_element_type=f32) + pb_ref[...])
    logits = jnp.dot(pooled, cw_ref[...], preferred_element_type=f32) + cb_ref[...]
    out_ref[...] = logits.astype(out_ref.dtype)                                # [B, C]


# ----------------------------- parameter init -----------------------------
def init_params(key):
    keys = iter(jax.random.split(key, 64))

    def nrm(shape, scale=0.02):
        return (scale * jax.random.normal(next(keys), shape)).astype(jnp.float32)

    return {
        "word": nrm((VOCAB, HIDDEN)),
        "pos": nrm((MAX_POS, HIDDEN)),
        "type": nrm((TYPE_VOCAB, HIDDEN)),
        "emb_ln_g": jnp.ones((1, HIDDEN), jnp.float32),
        "emb_ln_b": jnp.zeros((1, HIDDEN), jnp.float32),
        # fused QKV weight: wq | wk | wv along the output axis
        "wqkv": nrm((LAYERS, HIDDEN, 3 * HIDDEN)),
        "bqkv": jnp.zeros((LAYERS, 1, 3 * HIDDEN), jnp.float32),
        "wo": nrm((LAYERS, HIDDEN, HIDDEN)),
        "bo": jnp.zeros((LAYERS, 1, HIDDEN), jnp.float32),
        "ln1_g": jnp.ones((LAYERS, 1, HIDDEN), jnp.float32),
        "ln1_b": jnp.zeros((LAYERS, 1, HIDDEN), jnp.float32),
        "w1": nrm((LAYERS, HIDDEN, INTERMEDIATE)),
        "b1": jnp.zeros((LAYERS, 1, INTERMEDIATE), jnp.float32),
        "w2": nrm((LAYERS, INTERMEDIATE, HIDDEN)),
        "b2": jnp.zeros((LAYERS, 1, HIDDEN), jnp.float32),
        "ln2_g": jnp.ones((LAYERS, 1, HIDDEN), jnp.float32),
        "ln2_b": jnp.zeros((LAYERS, 1, HIDDEN), jnp.float32),
        "pooler_w": nrm((HIDDEN, HIDDEN)),
        "pooler_b": jnp.zeros((1, HIDDEN), jnp.float32),
        "cls_w": nrm((HIDDEN, NUM_CLASS)),
        "cls_b": jnp.zeros((1, NUM_CLASS), jnp.float32),
    }


# ----------------------------- forward pass -----------------------------
def bert_classifier_forward(params, input_ids, attention_mask, token_type):
    B, S = input_ids.shape
    T = B * S

    # Token/type ids flattened to [T, 1] int32 (looked up INSIDE the kernel).
    ids = input_ids.reshape(T, 1).astype(jnp.int32)
    tt = token_type.reshape(T, 1).astype(jnp.int32)
    # Extended attention mask: (1 - mask) * -10000 additive bias, [B, S].
    mask_bias = (1.0 - attention_mask.astype(jnp.float32)) * -10000.0

    weights = (params["word"], params["pos"], params["type"],
               params["emb_ln_g"], params["emb_ln_b"],
               params["wqkv"], params["bqkv"], params["wo"], params["bo"],
               params["ln1_g"], params["ln1_b"], params["w1"], params["b1"],
               params["w2"], params["b2"], params["ln2_g"], params["ln2_b"],
               params["pooler_w"], params["pooler_b"],
               params["cls_w"], params["cls_b"])

    inputs = (ids, tt, mask_bias) + weights
    vmem_spec = pl.BlockSpec(memory_space=pltpu.MemorySpace.VMEM)   # full array in VMEM

    out = pl.pallas_call(
        functools.partial(_bert_kernel, B=B, S=S),
        out_shape=jax.ShapeDtypeStruct((B, NUM_CLASS), jnp.float32),
        in_specs=[vmem_spec] * len(inputs),
        out_specs=vmem_spec,
    )(*inputs)

    return out                                                       # [B, num_class]


# ----------------------------- main -----------------------------
if __name__ == "__main__":
    key = jax.random.PRNGKey(0)
    k_params, k_ids = jax.random.split(key, 2)

    params = init_params(k_params)

    B, S = 2, 8
    input_ids = jax.random.randint(k_ids, (B, S), 0, VOCAB, dtype=jnp.int32)
    attention_mask = jnp.ones((B, S), dtype=jnp.int32).at[:, 6:].set(0)   # last 2 tokens padded
    token_type = jnp.zeros((B, S), dtype=jnp.int32).at[:, 4:].set(1)

    forward = jax.jit(bert_classifier_forward)
    logits = forward(params, input_ids, attention_mask, token_type)
    jax.block_until_ready(logits)
    assert logits.shape == (B, NUM_CLASS)
    print("KERNEL_OK")
</pallas_src>

<mosaic_0001>
module attributes {stable_mosaic.version = 11 : i64} {
  func.func @_bert_kernel(%arg0: memref<16x1xi32, #tpu.memory_space<vmem>>, %arg1: memref<16x1xi32, #tpu.memory_space<vmem>>, %arg2: memref<2x8xf32, #tpu.memory_space<vmem>>, %arg3: memref<100x32xf32, #tpu.memory_space<vmem>>, %arg4: memref<32x32xf32, #tpu.memory_space<vmem>>, %arg5: memref<2x32xf32, #tpu.memory_space<vmem>>, %arg6: memref<1x32xf32, #tpu.memory_space<vmem>>, %arg7: memref<1x32xf32, #tpu.memory_space<vmem>>, %arg8: memref<2x32x96xf32, #tpu.memory_space<vmem>>, %arg9: memref<2x1x96xf32, #tpu.memory_space<vmem>>, %arg10: memref<2x32x32xf32, #tpu.memory_space<vmem>>, %arg11: memref<2x1x32xf32, #tpu.memory_space<vmem>>, %arg12: memref<2x1x32xf32, #tpu.memory_space<vmem>>, %arg13: memref<2x1x32xf32, #tpu.memory_space<vmem>>, %arg14: memref<2x32x64xf32, #tpu.memory_space<vmem>>, %arg15: memref<2x1x64xf32, #tpu.memory_space<vmem>>, %arg16: memref<2x64x32xf32, #tpu.memory_space<vmem>>, %arg17: memref<2x1x32xf32, #tpu.memory_space<vmem>>, %arg18: memref<2x1x32xf32, #tpu.memory_space<vmem>>, %arg19: memref<2x1x32xf32, #tpu.memory_space<vmem>>, %arg20: memref<32x32xf32, #tpu.memory_space<vmem>>, %arg21: memref<1x32xf32, #tpu.memory_space<vmem>>, %arg22: memref<32x3xf32, #tpu.memory_space<vmem>>, %arg23: memref<1x3xf32, #tpu.memory_space<vmem>>, %arg24: memref<2x3xf32, #tpu.memory_space<vmem>>) attributes {dimension_semantics = [], scalar_prefetch = 0 : i64, scratch_operands = 0 : i64, tpu.core_type = #tpu.core_type<tc>} {
    %c0 = arith.constant 0 : index
    %c0_0 = arith.constant 0 : index
    %0 = vector.load %arg0[%c0, %c0_0] : memref<16x1xi32, #tpu.memory_space<vmem>>, vector<16x1xi32>
    %c0_1 = arith.constant 0 : index
    %c0_2 = arith.constant 0 : index
    %1 = vector.load %arg1[%c0_1, %c0_2] : memref<16x1xi32, #tpu.memory_space<vmem>>, vector<16x1xi32>
    %2 = tpu.iota {dimensions = array<i32: 1>} : vector<16x100xi32>
    %3 = vector.broadcast %0 : vector<16x1xi32> to vector<16x100xi32>
    %4 = arith.cmpi eq, %2, %3 : vector<16x100xi32>
    %5 = arith.extui %4 : vector<16x100xi1> to vector<16x100xi32>
    %6 = arith.sitofp %5 : vector<16x100xi32> to vector<16x100xf32>
    %7 = tpu.iota {dimensions = array<i32: 1>} : vector<16x2xi32>
    %8 = vector.broadcast %1 : vector<16x1xi32> to vector<16x2xi32>
    %9 = arith.cmpi eq, %7, %8 : vector<16x2xi32>
    %10 = arith.extui %9 : vector<16x2xi1> to vector<16x2xi32>
    %11 = arith.sitofp %10 : vector<16x2xi32> to vector<16x2xf32>
    %c0_3 = arith.constant 0 : index
    %c0_4 = arith.constant 0 : index
    %12 = vector.load %arg4[%c0_3, %c0_4] : memref<32x32xf32, #tpu.memory_space<vmem>>, vector<8x32xf32>
    %13 = tpu.concatenate %12, %12 in 0 : vector<8x32xf32>, vector<8x32xf32> -> vector<16x32xf32>
    %c0_5 = arith.constant 0 : index
    %c0_6 = arith.constant 0 : index
    %14 = vector.load %arg3[%c0_5, %c0_6] : memref<100x32xf32, #tpu.memory_space<vmem>>, vector<100x32xf32>
    %cst = arith.constant dense<0.000000e+00> : vector<16x32xf32>
    %15 = tpu.matmul %6, %14, %cst {dimension_numbers = #tpu.dot_dimension_numbers<[1], [0], [0], [1], [0, 0, 1, 1], [], []>} : vector<16x100xf32>, vector<100x32xf32>, vector<16x32xf32> -> vector<16x32xf32>
    %16 = arith.addf %15, %13 : vector<16x32xf32>
    %c0_7 = arith.constant 0 : index
    %c0_8 = arith.constant 0 : index
    %17 = vector.load %arg5[%c0_7, %c0_8] : memref<2x32xf32, #tpu.memory_space<vmem>>, vector<2x32xf32>
    %cst_9 = arith.constant dense<0.000000e+00> : vector<16x32xf32>
    %18 = tpu.matmul %11, %17, %cst_9 {dimension_numbers = #tpu.dot_dimension_numbers<[1], [0], [0], [1], [0, 0, 1, 1], [], []>} : vector<16x2xf32>, vector<2x32xf32>, vector<16x32xf32> -> vector<16x32xf32>
    %19 = arith.addf %16, %18 : vector<16x32xf32>
    %c0_10 = arith.constant 0 : index
    %c0_11 = arith.constant 0 : index
    %20 = vector.load %arg6[%c0_10, %c0_11] : memref<1x32xf32, #tpu.memory_space<vmem>>, vector<1x32xf32>
    %c0_12 = arith.constant 0 : index
    %c0_13 = arith.constant 0 : index
    %21 = vector.load %arg7[%c0_12, %c0_13] : memref<1x32xf32, #tpu.memory_space<vmem>>, vector<1x32xf32>
    %cst_14 = arith.constant dense<0.000000e+00> : vector<16xf32>
    %22 = vector.multi_reduction <add>, %19, %cst_14 [1] : vector<16x32xf32> to vector<16xf32>
    %23 = vector.shape_cast %22 : vector<16xf32> to vector<16x1xf32>
    %cst_15 = arith.constant 3.200000e+01 : f32
    %24 = vector.broadcast %cst_15 : f32 to vector<16x1xf32>
    %25 = arith.divf %23, %24 : vector<16x1xf32>
    %26 = vector.broadcast %25 : vector<16x1xf32> to vector<16x32xf32>
    %27 = arith.subf %19, %26 : vector<16x32xf32>
    %28 = arith.mulf %27, %27 : vector<16x32xf32>
    %cst_16 = arith.constant dense<0.000000e+00> : vector<16xf32>
    %29 = vector.multi_reduction <add>, %28, %cst_16 [1] : vector<16x32xf32> to vector<16xf32>
    %30 = vector.shape_cast %29 : vector<16xf32> to vector<16x1xf32>
    %cst_17 = arith.constant 3.200000e+01 : f32
    %31 = vector.broadcast %cst_17 : f32 to vector<16x1xf32>
    %32 = arith.divf %30, %31 : vector<16x1xf32>
    %33 = vector.broadcast %25 : vector<16x1xf32> to vector<16x32xf32>
    %34 = arith.subf %19, %33 : vector<16x32xf32>
    %cst_18 = arith.constant 9.99999996E-13 : f32
    %35 = vector.broadcast %cst_18 : f32 to vector<16x1xf32>
    %36 = arith.addf %32, %35 : vector<16x1xf32>
    %37 = math.rsqrt %36 : vector<16x1xf32>
    %38 = vector.broadcast %37 : vector<16x1xf32> to vector<16x32xf32>
    %39 = arith.mulf %34, %38 : vector<16x32xf32>
    %40 = vector.broadcast %20 : vector<1x32xf32> to vector<16x32xf32>
    %41 = arith.mulf %39, %40 : vector<16x32xf32>
    %42 = vector.broadcast %21 : vector<1x32xf32> to vector<16x32xf32>
    %43 = arith.addf %41, %42 : vector<16x32xf32>
    %c0_19 = arith.constant 0 : index
    %c0_20 = arith.constant 0 : index
    %c0_21 = arith.constant 0 : index
    %44 = vector.load %arg8[%c0_19, %c0_20, %c0_21] : memref<2x32x96xf32, #tpu.memory_space<vmem>>, vector<1x32x96xf32>
    %45 = vector.shape_cast %44 : vector<1x32x96xf32> to vector<32x96xf32>
    %cst_22 = arith.constant dense<0.000000e+00> : vector<16x96xf32>
    %46 = tpu.matmul %43, %45, %cst_22 {dimension_numbers = #tpu.dot_dimension_numbers<[1], [0], [0], [1], [0, 0, 1, 1], [], []>} : vector<16x32xf32>, vector<32x96xf32>, vector<16x96xf32> -> vector<16x96xf32>
    %c0_23 = arith.constant 0 : index
    %c0_24 = arith.constant 0 : index
    %c0_25 = arith.constant 0 : index
    %47 = vector.load %arg9[%c0_23, %c0_24, %c0_25] : memref<2x1x96xf32, #tpu.memory_space<vmem>>, vector<1x1x96xf32>
    %48 = vector.shape_cast %47 : vector<1x1x96xf32> to vector<1x96xf32>
    %49 = vector.broadcast %48 : vector<1x96xf32> to vector<16x96xf32>
    %50 = arith.addf %46, %49 : vector<16x96xf32>
    %c0_26 = arith.constant 0 : index
    %c0_27 = arith.constant 0 : index
    %51 = vector.load %arg2[%c0_26, %c0_27] : memref<2x8xf32, #tpu.memory_space<vmem>>, vector<1x8xf32>
    %52 = vector.extract_strided_slice %50 {offsets = [0, 0], sizes = [8, 16], strides = [1, 1]} : vector<16x96xf32> to vector<8x16xf32>
    %53 = vector.extract_strided_slice %50 {offsets = [0, 32], sizes = [8, 16], strides = [1, 1]} : vector<16x96xf32> to vector<8x16xf32>
    %54 = vector.extract_strided_slice %50 {offsets = [0, 64], sizes = [8, 16], strides = [1, 1]} : vector<16x96xf32> to vector<8x16xf32>
    %cst_28 = arith.constant dense<0.000000e+00> : vector<8x8xf32>
    %55 = tpu.matmul %52, %53, %cst_28 {dimension_numbers = #tpu.dot_dimension_numbers<[1], [1], [0], [0], [0, 0, 1, 0], [], []>} : vector<8x16xf32>, vector<8x16xf32>, vector<8x8xf32> -> vector<8x8xf32>
    %cst_29 = arith.constant 2.500000e-01 : f32
    %56 = vector.broadcast %cst_29 : f32 to vector<8x8xf32>
    %57 = arith.mulf %55, %56 : vector<8x8xf32>
    %58 = vector.broadcast %51 : vector<1x8xf32> to vector<8x8xf32>
    %59 = arith.addf %57, %58 : vector<8x8xf32>
    %cst_30 = arith.constant dense<0xFF800000> : vector<8xf32>
    %60 = vector.multi_reduction <maximumf>, %59, %cst_30 [1] : vector<8x8xf32> to vector<8xf32>
    %61 = vector.shape_cast %60 : vector<8xf32> to vector<8x1xf32>
    %62 = vector.broadcast %61 : vector<8x1xf32> to vector<8x8xf32>
    %63 = arith.subf %59, %62 : vector<8x8xf32>
    %64 = math.exp %63 : vector<8x8xf32>
    %cst_31 = arith.constant dense<0.000000e+00> : vector<8xf32>
    %65 = vector.multi_reduction <add>, %64, %cst_31 [1] : vector<8x8xf32> to vector<8xf32>
    %66 = vector.shape_cast %65 : vector<8xf32> to vector<8x1xf32>
    %67 = tpu.reciprocal %66 {approx = true} : vector<8x1xf32> -> vector<8x1xf32>
    %68 = vector.broadcast %67 : vector<8x1xf32> to vector<8x8xf32>
    %69 = arith.mulf %64, %68 : vector<8x8xf32>
    %cst_32 = arith.constant dense<0.000000e+00> : vector<8x16xf32>
    %70 = tpu.matmul %69, %54, %cst_32 {dimension_numbers = #tpu.dot_dimension_numbers<[1], [0], [0], [1], [0, 0, 1, 1], [], []>} : vector<8x8xf32>, vector<8x16xf32>, vector<8x16xf32> -> vector<8x16xf32>
    %71 = vector.extract_strided_slice %50 {offsets = [0, 16], sizes = [8, 16], strides = [1, 1]} : vector<16x96xf32> to vector<8x16xf32>
    %72 = vector.extract_strided_slice %50 {offsets = [0, 48], sizes = [8, 16], strides = [1, 1]} : vector<16x96xf32> to vector<8x16xf32>
    %73 = vector.extract_strided_slice %50 {offsets = [0, 80], sizes = [8, 16], strides = [1, 1]} : vector<16x96xf32> to vector<8x16xf32>
    %cst_33 = arith.constant dense<0.000000e+00> : vector<8x8xf32>
    %74 = tpu.matmul %71, %72, %cst_33 {dimension_numbers = #tpu.dot_dimension_numbers<[1], [1], [0], [0], [0, 0, 1, 0], [], []>} : vector<8x16xf32>, vector<8x16xf32>, vector<8x8xf32> -> vector<8x8xf32>
    %cst_34 = arith.constant 2.500000e-01 : f32
    %75 = vector.broadcast %cst_34 : f32 to vector<8x8xf32>
    %76 = arith.mulf %74, %75 : vector<8x8xf32>
    %77 = vector.broadcast %51 : vector<1x8xf32> to vector<8x8xf32>
    %78 = arith.addf %76, %77 : vector<8x8xf32>
    %cst_35 = arith.constant dense<0xFF800000> : vector<8xf32>
    %79 = vector.multi_reduction <maximumf>, %78, %cst_35 [1] : vector<8x8xf32> to vector<8xf32>
    %80 = vector.shape_cast %79 : vector<8xf32> to vector<8x1xf32>
    %81 = vector.broadcast %80 : vector<8x1xf32> to vector<8x8xf32>
    %82 = arith.subf %78, %81 : vector<8x8xf32>
    %83 = math.exp %82 : vector<8x8xf32>
    %cst_36 = arith.constant dense<0.000000e+00> : vector<8xf32>
    %84 = vector.multi_reduction <add>, %83, %cst_36 [1] : vector<8x8xf32> to vector<8xf32>
    %85 = vector.shape_cast %84 : vector<8xf32> to vector<8x1xf32>
    %86 = tpu.reciprocal %85 {approx = true} : vector<8x1xf32> -> vector<8x1xf32>
    %87 = vector.broadcast %86 : vector<8x1xf32> to vector<8x8xf32>
    %88 = arith.mulf %83, %87 : vector<8x8xf32>
    %cst_37 = arith.constant dense<0.000000e+00> : vector<8x16xf32>
    %89 = tpu.matmul %88, %73, %cst_37 {dimension_numbers = #tpu.dot_dimension_numbers<[1], [0], [0], [1], [0, 0, 1, 1], [], []>} : vector<8x8xf32>, vector<8x16xf32>, vector<8x16xf32> -> vector<8x16xf32>
    %90 = tpu.concatenate %70, %89 in 1 : vector<8x16xf32>, vector<8x16xf32> -> vector<8x32xf32>
    %c1 = arith.constant 1 : index
    %c0_38 = arith.constant 0 : index
    %91 = vector.load %arg2[%c1, %c0_38] : memref<2x8xf32, #tpu.memory_space<vmem>>, vector<1x8xf32>
    %92 = vector.extract_strided_slice %50 {offsets = [8, 0], sizes = [8, 16], strides = [1, 1]} : vector<16x96xf32> to vector<8x16xf32>
    %93 = vector.extract_strided_slice %50 {offsets = [8, 32], sizes = [8, 16], strides = [1, 1]} : vector<16x96xf32> to vector<8x16xf32>
    %94 = vector.extract_strided_slice %50 {offsets = [8, 64], sizes = [8, 16], strides = [1, 1]} : vector<16x96xf32> to vector<8x16xf32>
    %cst_39 = arith.constant dense<0.000000e+00> : vector<8x8xf32>
    %95 = tpu.matmul %92, %93, %cst_39 {dimension_numbers = #tpu.dot_dimension_numbers<[1], [1], [0], [0], [0, 0, 1, 0], [], []>} : vector<8x16xf32>, vector<8x16xf32>, vector<8x8xf32> -> vector<8x8xf32>
    %cst_40 = arith.constant 2.500000e-01 : f32
    %96 = vector.broadcast %cst_40 : f32 to vector<8x8xf32>
    %97 = arith.mulf %95, %96 : vector<8x8xf32>
    %98 = vector.broadcast %91 : vector<1x8xf32> to vector<8x8xf32>
    %99 = arith.addf %97, %98 : vector<8x8xf32>
    %cst_41 = arith.constant dense<0xFF800000> : vector<8xf32>
    %100 = vector.multi_reduction <maximumf>, %99, %cst_41 [1] : vector<8x8xf32> to vector<8xf32>
    %101 = vector.shape_cast %100 : vector<8xf32> to vector<8x1xf32>
    %102 = vector.broadcast %101 : vector<8x1xf32> to vector<8x8xf32>
    %103 = arith.subf %99, %102 : vector<8x8xf32>
    %104 = math.exp %103 : vector<8x8xf32>
    %cst_42 = arith.constant dense<0.000000e+00> : vector<8xf32>
    %105 = vector.multi_reduction <add>, %104, %cst_42 [1] : vector<8x8xf32> to vector<8xf32>
    %106 = vector.shape_cast %105 : vector<8xf32> to vector<8x1xf32>
    %107 = tpu.reciprocal %106 {approx = true} : vector<8x1xf32> -> vector<8x1xf32>
    %108 = vector.broadcast %107 : vector<8x1xf32> to vector<8x8xf32>
    %109 = arith.mulf %104, %108 : vector<8x8xf32>
    %cst_43 = arith.constant dense<0.000000e+00> : vector<8x16xf32>
    %110 = tpu.matmul %109, %94, %cst_43 {dimension_numbers = #tpu.dot_dimension_numbers<[1], [0], [0], [1], [0, 0, 1, 1], [], []>} : vector<8x8xf32>, vector<8x16xf32>, vector<8x16xf32> -> vector<8x16xf32>
    %111 = vector.extract_strided_slice %50 {offsets = [8, 16], sizes = [8, 16], strides = [1, 1]} : vector<16x96xf32> to vector<8x16xf32>
    %112 = vector.extract_strided_slice %50 {offsets = [8, 48], sizes = [8, 16], strides = [1, 1]} : vector<16x96xf32> to vector<8x16xf32>
    %113 = vector.extract_strided_slice %50 {offsets = [8, 80], sizes = [8, 16], strides = [1, 1]} : vector<16x96xf32> to vector<8x16xf32>
    %cst_44 = arith.constant dense<0.000000e+00> : vector<8x8xf32>
    %114 = tpu.matmul %111, %112, %cst_44 {dimension_numbers = #tpu.dot_dimension_numbers<[1], [1], [0], [0], [0, 0, 1, 0], [], []>} : vector<8x16xf32>, vector<8x16xf32>, vector<8x8xf32> -> vector<8x8xf32>
    %cst_45 = arith.constant 2.500000e-01 : f32
    %115 = vector.broadcast %cst_45 : f32 to vector<8x8xf32>
    %116 = arith.mulf %114, %115 : vector<8x8xf32>
    %117 = vector.broadcast %91 : vector<1x8xf32> to vector<8x8xf32>
    %118 = arith.addf %116, %117 : vector<8x8xf32>
    %cst_46 = arith.constant dense<0xFF800000> : vector<8xf32>
    %119 = vector.multi_reduction <maximumf>, %118, %cst_46 [1] : vector<8x8xf32> to vector<8xf32>
    %120 = vector.shape_cast %119 : vector<8xf32> to vector<8x1xf32>
    %121 = vector.broadcast %120 : vector<8x1xf32> to vector<8x8xf32>
    %122 = arith.subf %118, %121 : vector<8x8xf32>
    %123 = math.exp %122 : vector<8x8xf32>
    %cst_47 = arith.constant dense<0.000000e+00> : vector<8xf32>
    %124 = vector.multi_reduction <add>, %123, %cst_47 [1] : vector<8x8xf32> to vector<8xf32>
    %125 = vector.shape_cast %124 : vector<8xf32> to vector<8x1xf32>
    %126 = tpu.reciprocal %125 {approx = true} : vector<8x1xf32> -> vector<8x1xf32>
    %127 = vector.broadcast %126 : vector<8x1xf32> to vector<8x8xf32>
    %128 = arith.mulf %123, %127 : vector<8x8xf32>
    %cst_48 = arith.constant dense<0.000000e+00> : vector<8x16xf32>
    %129 = tpu.matmul %128, %113, %cst_48 {dimension_numbers = #tpu.dot_dimension_numbers<[1], [0], [0], [1], [0, 0, 1, 1], [], []>} : vector<8x8xf32>, vector<8x16xf32>, vector<8x16xf32> -> vector<8x16xf32>
    %130 = tpu.concatenate %110, %129 in 1 : vector<8x16xf32>, vector<8x16xf32> -> vector<8x32xf32>
    %131 = tpu.concatenate %90, %130 in 0 : vector<8x32xf32>, vector<8x32xf32> -> vector<16x32xf32>
    %c0_49 = arith.constant 0 : index
    %c0_50 = arith.constant 0 : index
    %c0_51 = arith.constant 0 : index
    %132 = vector.load %arg10[%c0_49, %c0_50, %c0_51] : memref<2x32x32xf32, #tpu.memory_space<vmem>>, vector<1x32x32xf32>
    %133 = vector.shape_cast %132 : vector<1x32x32xf32> to vector<32x32xf32>
    %cst_52 = arith.constant dense<0.000000e+00> : vector<16x32xf32>
    %134 = tpu.matmul %131, %133, %cst_52 {dimension_numbers = #tpu.dot_dimension_numbers<[1], [0], [0], [1], [0, 0, 1, 1], [], []>} : vector<16x32xf32>, vector<32x32xf32>, vector<16x32xf32> -> vector<16x32xf32>
    %c0_53 = arith.constant 0 : index
    %c0_54 = arith.constant 0 : index
    %c0_55 = arith.constant 0 : index
    %135 = vector.load %arg11[%c0_53, %c0_54, %c0_55] : memref<2x1x32xf32, #tpu.memory_space<vmem>>, vector<1x1x32xf32>
    %136 = vector.shape_cast %135 : vector<1x1x32xf32> to vector<1x32xf32>
    %137 = vector.broadcast %136 : vector<1x32xf32> to vector<16x32xf32>
    %138 = arith.addf %134, %137 : vector<16x32xf32>
    %139 = arith.addf %43, %138 : vector<16x32xf32>
    %c0_56 = arith.constant 0 : index
    %c0_57 = arith.constant 0 : index
    %c0_58 = arith.constant 0 : index
    %140 = vector.load %arg12[%c0_56, %c0_57, %c0_58] : memref<2x1x32xf32, #tpu.memory_space<vmem>>, vector<1x1x32xf32>
    %141 = vector.shape_cast %140 : vector<1x1x32xf32> to vector<1x32xf32>
    %c0_59 = arith.constant 0 : index
    %c0_60 = arith.constant 0 : index
    %c0_61 = arith.constant 0 : index
    %142 = vector.load %arg13[%c0_59, %c0_60, %c0_61] : memref<2x1x32xf32, #tpu.memory_space<vmem>>, vector<1x1x32xf32>
    %143 = vector.shape_cast %142 : vector<1x1x32xf32> to vector<1x32xf32>
    %cst_62 = arith.constant dense<0.000000e+00> : vector<16xf32>
    %144 = vector.multi_reduction <add>, %139, %cst_62 [1] : vector<16x32xf32> to vector<16xf32>
    %145 = vector.shape_cast %144 : vector<16xf32> to vector<16x1xf32>
    %cst_63 = arith.constant 3.200000e+01 : f32
    %146 = vector.broadcast %cst_63 : f32 to vector<16x1xf32>
    %147 = arith.divf %145, %146 : vector<16x1xf32>
    %148 = vector.broadcast %147 : vector<16x1xf32> to vector<16x32xf32>
    %149 = arith.subf %139, %148 : vector<16x32xf32>
    %150 = arith.mulf %149, %149 : vector<16x32xf32>
    %cst_64 = arith.constant dense<0.000000e+00> : vector<16xf32>
    %151 = vector.multi_reduction <add>, %150, %cst_64 [1] : vector<16x32xf32> to vector<16xf32>
    %152 = vector.shape_cast %151 : vector<16xf32> to vector<16x1xf32>
    %cst_65 = arith.constant 3.200000e+01 : f32
    %153 = vector.broadcast %cst_65 : f32 to vector<16x1xf32>
    %154 = arith.divf %152, %153 : vector<16x1xf32>
    %155 = vector.broadcast %147 : vector<16x1xf32> to vector<16x32xf32>
    %156 = arith.subf %139, %155 : vector<16x32xf32>
    %cst_66 = arith.constant 9.99999996E-13 : f32
    %157 = vector.broadcast %cst_66 : f32 to vector<16x1xf32>
    %158 = arith.addf %154, %157 : vector<16x1xf32>
    %159 = math.rsqrt %158 : vector<16x1xf32>
    %160 = vector.broadcast %159 : vector<16x1xf32> to vector<16x32xf32>
    %161 = arith.mulf %156, %160 : vector<16x32xf32>
    %162 = vector.broadcast %141 : vector<1x32xf32> to vector<16x32xf32>
    %163 = arith.mulf %161, %162 : vector<16x32xf32>
    %164 = vector.broadcast %143 : vector<1x32xf32> to vector<16x32xf32>
    %165 = arith.addf %163, %164 : vector<16x32xf32>
    %c0_67 = arith.constant 0 : index
    %c0_68 = arith.constant 0 : index
    %c0_69 = arith.constant 0 : index
    %166 = vector.load %arg14[%c0_67, %c0_68, %c0_69] : memref<2x32x64xf32, #tpu.memory_space<vmem>>, vector<1x32x64xf32>
    %167 = vector.shape_cast %166 : vector<1x32x64xf32> to vector<32x64xf32>
    %cst_70 = arith.constant dense<0.000000e+00> : vector<16x64xf32>
    %168 = tpu.matmul %165, %167, %cst_70 {dimension_numbers = #tpu.dot_dimension_numbers<[1], [0], [0], [1], [0, 0, 1, 1], [], []>} : vector<16x32xf32>, vector<32x64xf32>, vector<16x64xf32> -> vector<16x64xf32>
    %c0_71 = arith.constant 0 : index
    %c0_72 = arith.constant 0 : index
    %c0_73 = arith.constant 0 : index
    %169 = vector.load %arg15[%c0_71, %c0_72, %c0_73] : memref<2x1x64xf32, #tpu.memory_space<vmem>>, vector<1x1x64xf32>
    %170 = vector.shape_cast %169 : vector<1x1x64xf32> to vector<1x64xf32>
    %171 = vector.broadcast %170 : vector<1x64xf32> to vector<16x64xf32>
    %172 = arith.addf %168, %171 : vector<16x64xf32>
    %cst_74 = arith.constant 5.000000e-01 : f32
    %173 = vector.broadcast %cst_74 : f32 to vector<16x64xf32>
    %174 = arith.mulf %173, %172 : vector<16x64xf32>
    %cst_75 = arith.constant 0.707106769 : f32
    %175 = vector.broadcast %cst_75 : f32 to vector<16x64xf32>
    %176 = arith.mulf %172, %175 : vector<16x64xf32>
    %177 = math.absf %176 : vector<16x64xf32>
    %cst_76 = arith.constant 0.327591091 : f32
    %178 = vector.broadcast %cst_76 : f32 to vector<16x64xf32>
    %179 = arith.mulf %178, %177 : vector<16x64xf32>
    %cst_77 = arith.constant 1.000000e+00 : f32
    %180 = vector.broadcast %cst_77 : f32 to vector<16x64xf32>
    %181 = arith.addf %180, %179 : vector<16x64xf32>
    %cst_78 = arith.constant 1.000000e+00 : f32
    %182 = vector.broadcast %cst_78 : f32 to vector<16x64xf32>
    %183 = arith.divf %182, %181 : vector<16x64xf32>
    %cst_79 = arith.constant 1.06140542 : f32
    %184 = vector.broadcast %cst_79 : f32 to vector<16x64xf32>
    %185 = arith.mulf %184, %183 : vector<16x64xf32>
    %cst_80 = arith.constant -1.45315206 : f32
    %186 = vector.broadcast %cst_80 : f32 to vector<16x64xf32>
    %187 = arith.addf %185, %186 : vector<16x64xf32>
    %188 = arith.mulf %187, %183 : vector<16x64xf32>
    %cst_81 = arith.constant 1.42141378 : f32
    %189 = vector.broadcast %cst_81 : f32 to vector<16x64xf32>
    %190 = arith.addf %188, %189 : vector<16x64xf32>
    %191 = arith.mulf %190, %183 : vector<16x64xf32>
    %cst_82 = arith.constant -0.284496725 : f32
    %192 = vector.broadcast %cst_82 : f32 to vector<16x64xf32>
    %193 = arith.addf %191, %192 : vector<16x64xf32>
    %194 = arith.mulf %193, %183 : vector<16x64xf32>
    %cst_83 = arith.constant 0.254829586 : f32
    %195 = vector.broadcast %cst_83 : f32 to vector<16x64xf32>
    %196 = arith.addf %194, %195 : vector<16x64xf32>
    %197 = arith.mulf %196, %183 : vector<16x64xf32>
    %cst_84 = arith.constant 0.000000e+00 : f32
    %198 = vector.broadcast %cst_84 : f32 to vector<16x64xf32>
    %199 = arith.subf %198, %177 : vector<16x64xf32>
    %200 = arith.mulf %199, %177 : vector<16x64xf32>
    %201 = math.exp %200 : vector<16x64xf32>
    %202 = arith.mulf %197, %201 : vector<16x64xf32>
    %cst_85 = arith.constant 1.000000e+00 : f32
    %203 = vector.broadcast %cst_85 : f32 to vector<16x64xf32>
    %204 = arith.subf %203, %202 : vector<16x64xf32>
    %cst_86 = arith.constant 0.000000e+00 : f32
    %205 = vector.broadcast %cst_86 : f32 to vector<16x64xf32>
    %206 = arith.cmpf oge, %176, %205 : vector<16x64xf32>
    %cst_87 = arith.constant 0.000000e+00 : f32
    %207 = vector.broadcast %cst_87 : f32 to vector<16x64xf32>
    %208 = arith.subf %207, %204 : vector<16x64xf32>
    %209 = arith.select %206, %204, %208 : vector<16x64xi1>, vector<16x64xf32>
    %cst_88 = arith.constant 1.000000e+00 : f32
    %210 = vector.broadcast %cst_88 : f32 to vector<16x64xf32>
    %211 = arith.addf %210, %209 : vector<16x64xf32>
    %212 = arith.mulf %174, %211 : vector<16x64xf32>
    %c0_89 = arith.constant 0 : index
    %c0_90 = arith.constant 0 : index
    %c0_91 = arith.constant 0 : index
    %213 = vector.load %arg16[%c0_89, %c0_90, %c0_91] : memref<2x64x32xf32, #tpu.memory_space<vmem>>, vector<1x64x32xf32>
    %214 = vector.shape_cast %213 : vector<1x64x32xf32> to vector<64x32xf32>
    %cst_92 = arith.constant dense<0.000000e+00> : vector<16x32xf32>
    %215 = tpu.matmul %212, %214, %cst_92 {dimension_numbers = #tpu.dot_dimension_numbers<[1], [0], [0], [1], [0, 0, 1, 1], [], []>} : vector<16x64xf32>, vector<64x32xf32>, vector<16x32xf32> -> vector<16x32xf32>
    %c0_93 = arith.constant 0 : index
    %c0_94 = arith.constant 0 : index
    %c0_95 = arith.constant 0 : index
    %216 = vector.load %arg17[%c0_93, %c0_94, %c0_95] : memref<2x1x32xf32, #tpu.memory_space<vmem>>, vector<1x1x32xf32>
    %217 = vector.shape_cast %216 : vector<1x1x32xf32> to vector<1x32xf32>
    %218 = vector.broadcast %217 : vector<1x32xf32> to vector<16x32xf32>
    %219 = arith.addf %215, %218 : vector<16x32xf32>
    %220 = arith.addf %165, %219 : vector<16x32xf32>
    %c0_96 = arith.constant 0 : index
    %c0_97 = arith.constant 0 : index
    %c0_98 = arith.constant 0 : index
    %221 = vector.load %arg18[%c0_96, %c0_97, %c0_98] : memref<2x1x32xf32, #tpu.memory_space<vmem>>, vector<1x1x32xf32>
    %222 = vector.shape_cast %221 : vector<1x1x32xf32> to vector<1x32xf32>
    %c0_99 = arith.constant 0 : index
    %c0_100 = arith.constant 0 : index
    %c0_101 = arith.constant 0 : index
    %223 = vector.load %arg19[%c0_99, %c0_100, %c0_101] : memref<2x1x32xf32, #tpu.memory_space<vmem>>, vector<1x1x32xf32>
    %224 = vector.shape_cast %223 : vector<1x1x32xf32> to vector<1x32xf32>
    %cst_102 = arith.constant dense<0.000000e+00> : vector<16xf32>
    %225 = vector.multi_reduction <add>, %220, %cst_102 [1] : vector<16x32xf32> to vector<16xf32>
    %226 = vector.shape_cast %225 : vector<16xf32> to vector<16x1xf32>
    %cst_103 = arith.constant 3.200000e+01 : f32
    %227 = vector.broadcast %cst_103 : f32 to vector<16x1xf32>
    %228 = arith.divf %226, %227 : vector<16x1xf32>
    %229 = vector.broadcast %228 : vector<16x1xf32> to vector<16x32xf32>
    %230 = arith.subf %220, %229 : vector<16x32xf32>
    %231 = arith.mulf %230, %230 : vector<16x32xf32>
    %cst_104 = arith.constant dense<0.000000e+00> : vector<16xf32>
    %232 = vector.multi_reduction <add>, %231, %cst_104 [1] : vector<16x32xf32> to vector<16xf32>
    %233 = vector.shape_cast %232 : vector<16xf32> to vector<16x1xf32>
    %cst_105 = arith.constant 3.200000e+01 : f32
    %234 = vector.broadcast %cst_105 : f32 to vector<16x1xf32>
    %235 = arith.divf %233, %234 : vector<16x1xf32>
    %236 = vector.broadcast %228 : vector<16x1xf32> to vector<16x32xf32>
    %237 = arith.subf %220, %236 : vector<16x32xf32>
    %cst_106 = arith.constant 9.99999996E-13 : f32
    %238 = vector.broadcast %cst_106 : f32 to vector<16x1xf32>
    %239 = arith.addf %235, %238 : vector<16x1xf32>
    %240 = math.rsqrt %239 : vector<16x1xf32>
    %241 = vector.broadcast %240 : vector<16x1xf32> to vector<16x32xf32>
    %242 = arith.mulf %237, %241 : vector<16x32xf32>
    %243 = vector.broadcast %222 : vector<1x32xf32> to vector<16x32xf32>
    %244 = arith.mulf %242, %243 : vector<16x32xf32>
    %245 = vector.broadcast %224 : vector<1x32xf32> to vector<16x32xf32>
    %246 = arith.addf %244, %245 : vector<16x32xf32>
    %c1_107 = arith.constant 1 : index
    %c0_108 = arith.constant 0 : index
    %c0_109 = arith.constant 0 : index
    %247 = vector.load %arg8[%c1_107, %c0_108, %c0_109] : memref<2x32x96xf32, #tpu.memory_space<vmem>>, vector<1x32x96xf32>
    %248 = vector.shape_cast %247 : vector<1x32x96xf32> to vector<32x96xf32>
    %cst_110 = arith.constant dense<0.000000e+00> : vector<16x96xf32>
    %249 = tpu.matmul %246, %248, %cst_110 {dimension_numbers = #tpu.dot_dimension_numbers<[1], [0], [0], [1], [0, 0, 1, 1], [], []>} : vector<16x32xf32>, vector<32x96xf32>, vector<16x96xf32> -> vector<16x96xf32>
    %c1_111 = arith.constant 1 : index
    %c0_112 = arith.constant 0 : index
    %c0_113 = arith.constant 0 : index
    %250 = vector.load %arg9[%c1_111, %c0_112, %c0_113] : memref<2x1x96xf32, #tpu.memory_space<vmem>>, vector<1x1x96xf32>
    %251 = vector.shape_cast %250 : vector<1x1x96xf32> to vector<1x96xf32>
    %252 = vector.broadcast %251 : vector<1x96xf32> to vector<16x96xf32>
    %253 = arith.addf %249, %252 : vector<16x96xf32>
    %c0_114 = arith.constant 0 : index
    %c0_115 = arith.constant 0 : index
    %254 = vector.load %arg2[%c0_114, %c0_115] : memref<2x8xf32, #tpu.memory_space<vmem>>, vector<1x8xf32>
    %255 = vector.extract_strided_slice %253 {offsets = [0, 0], sizes = [8, 16], strides = [1, 1]} : vector<16x96xf32> to vector<8x16xf32>
    %256 = vector.extract_strided_slice %253 {offsets = [0, 32], sizes = [8, 16], strides = [1, 1]} : vector<16x96xf32> to vector<8x16xf32>
    %257 = vector.extract_strided_slice %253 {offsets = [0, 64], sizes = [8, 16], strides = [1, 1]} : vector<16x96xf32> to vector<8x16xf32>
    %cst_116 = arith.constant dense<0.000000e+00> : vector<8x8xf32>
    %258 = tpu.matmul %255, %256, %cst_116 {dimension_numbers = #tpu.dot_dimension_numbers<[1], [1], [0], [0], [0, 0, 1, 0], [], []>} : vector<8x16xf32>, vector<8x16xf32>, vector<8x8xf32> -> vector<8x8xf32>
    %cst_117 = arith.constant 2.500000e-01 : f32
    %259 = vector.broadcast %cst_117 : f32 to vector<8x8xf32>
    %260 = arith.mulf %258, %259 : vector<8x8xf32>
    %261 = vector.broadcast %254 : vector<1x8xf32> to vector<8x8xf32>
    %262 = arith.addf %260, %261 : vector<8x8xf32>
    %cst_118 = arith.constant dense<0xFF800000> : vector<8xf32>
    %263 = vector.multi_reduction <maximumf>, %262, %cst_118 [1] : vector<8x8xf32> to vector<8xf32>
    %264 = vector.shape_cast %263 : vector<8xf32> to vector<8x1xf32>
    %265 = vector.broadcast %264 : vector<8x1xf32> to vector<8x8xf32>
    %266 = arith.subf %262, %265 : vector<8x8xf32>
    %267 = math.exp %266 : vector<8x8xf32>
    %cst_119 = arith.constant dense<0.000000e+00> : vector<8xf32>
    %268 = vector.multi_reduction <add>, %267, %cst_119 [1] : vector<8x8xf32> to vector<8xf32>
    %269 = vector.shape_cast %268 : vector<8xf32> to vector<8x1xf32>
    %270 = tpu.reciprocal %269 {approx = true} : vector<8x1xf32> -> vector<8x1xf32>
    %271 = vector.broadcast %270 : vector<8x1xf32> to vector<8x8xf32>
    %272 = arith.mulf %267, %271 : vector<8x8xf32>
    %cst_120 = arith.constant dense<0.000000e+00> : vector<8x16xf32>
    %273 = tpu.matmul %272, %257, %cst_120 {dimension_numbers = #tpu.dot_dimension_numbers<[1], [0], [0], [1], [0, 0, 1, 1], [], []>} : vector<8x8xf32>, vector<8x16xf32>, vector<8x16xf32> -> vector<8x16xf32>
    %274 = vector.extract_strided_slice %253 {offsets = [0, 16], sizes = [8, 16], strides = [1, 1]} : vector<16x96xf32> to vector<8x16xf32>
    %275 = vector.extract_strided_slice %253 {offsets = [0, 48], sizes = [8, 16], strides = [1, 1]} : vector<16x96xf32> to vector<8x16xf32>
    %276 = vector.extract_strided_slice %253 {offsets = [0, 80], sizes = [8, 16], strides = [1, 1]} : vector<16x96xf32> to vector<8x16xf32>
    %cst_121 = arith.constant dense<0.000000e+00> : vector<8x8xf32>
    %277 = tpu.matmul %274, %275, %cst_121 {dimension_numbers = #tpu.dot_dimension_numbers<[1], [1], [0], [0], [0, 0, 1, 0], [], []>} : vector<8x16xf32>, vector<8x16xf32>, vector<8x8xf32> -> vector<8x8xf32>
    %cst_122 = arith.constant 2.500000e-01 : f32
    %278 = vector.broadcast %cst_122 : f32 to vector<8x8xf32>
    %279 = arith.mulf %277, %278 : vector<8x8xf32>
    %280 = vector.broadcast %254 : vector<1x8xf32> to vector<8x8xf32>
    %281 = arith.addf %279, %280 : vector<8x8xf32>
    %cst_123 = arith.constant dense<0xFF800000> : vector<8xf32>
    %282 = vector.multi_reduction <maximumf>, %281, %cst_123 [1] : vector<8x8xf32> to vector<8xf32>
    %283 = vector.shape_cast %282 : vector<8xf32> to vector<8x1xf32>
    %284 = vector.broadcast %283 : vector<8x1xf32> to vector<8x8xf32>
    %285 = arith.subf %281, %284 : vector<8x8xf32>
    %286 = math.exp %285 : vector<8x8xf32>
    %cst_124 = arith.constant dense<0.000000e+00> : vector<8xf32>
    %287 = vector.multi_reduction <add>, %286, %cst_124 [1] : vector<8x8xf32> to vector<8xf32>
    %288 = vector.shape_cast %287 : vector<8xf32> to vector<8x1xf32>
    %289 = tpu.reciprocal %288 {approx = true} : vector<8x1xf32> -> vector<8x1xf32>
    %290 = vector.broadcast %289 : vector<8x1xf32> to vector<8x8xf32>
    %291 = arith.mulf %286, %290 : vector<8x8xf32>
    %cst_125 = arith.constant dense<0.000000e+00> : vector<8x16xf32>
    %292 = tpu.matmul %291, %276, %cst_125 {dimension_numbers = #tpu.dot_dimension_numbers<[1], [0], [0], [1], [0, 0, 1, 1], [], []>} : vector<8x8xf32>, vector<8x16xf32>, vector<8x16xf32> -> vector<8x16xf32>
    %293 = tpu.concatenate %273, %292 in 1 : vector<8x16xf32>, vector<8x16xf32> -> vector<8x32xf32>
    %c1_126 = arith.constant 1 : index
    %c0_127 = arith.constant 0 : index
    %294 = vector.load %arg2[%c1_126, %c0_127] : memref<2x8xf32, #tpu.memory_space<vmem>>, vector<1x8xf32>
    %295 = vector.extract_strided_slice %253 {offsets = [8, 0], sizes = [8, 16], strides = [1, 1]} : vector<16x96xf32> to vector<8x16xf32>
    %296 = vector.extract_strided_slice %253 {offsets = [8, 32], sizes = [8, 16], strides = [1, 1]} : vector<16x96xf32> to vector<8x16xf32>
    %297 = vector.extract_strided_slice %253 {offsets = [8, 64], sizes = [8, 16], strides = [1, 1]} : vector<16x96xf32> to vector<8x16xf32>
    %cst_128 = arith.constant dense<0.000000e+00> : vector<8x8xf32>
    %298 = tpu.matmul %295, %296, %cst_128 {dimension_numbers = #tpu.dot_dimension_numbers<[1], [1], [0], [0], [0, 0, 1, 0], [], []>} : vector<8x16xf32>, vector<8x16xf32>, vector<8x8xf32> -> vector<8x8xf32>
    %cst_129 = arith.constant 2.500000e-01 : f32
    %299 = vector.broadcast %cst_129 : f32 to vector<8x8xf32>
    %300 = arith.mulf %298, %299 : vector<8x8xf32>
    %301 = vector.broadcast %294 : vector<1x8xf32> to vector<8x8xf32>
    %302 = arith.addf %300, %301 : vector<8x8xf32>
    %cst_130 = arith.constant dense<0xFF800000> : vector<8xf32>
    %303 = vector.multi_reduction <maximumf>, %302, %cst_130 [1] : vector<8x8xf32> to vector<8xf32>
    %304 = vector.shape_cast %303 : vector<8xf32> to vector<8x1xf32>
    %305 = vector.broadcast %304 : vector<8x1xf32> to vector<8x8xf32>
    %306 = arith.subf %302, %305 : vector<8x8xf32>
    %307 = math.exp %306 : vector<8x8xf32>
    %cst_131 = arith.constant dense<0.000000e+00> : vector<8xf32>
    %308 = vector.multi_reduction <add>, %307, %cst_131 [1] : vector<8x8xf32> to vector<8xf32>
    %309 = vector.shape_cast %308 : vector<8xf32> to vector<8x1xf32>
    %310 = tpu.reciprocal %309 {approx = true} : vector<8x1xf32> -> vector<8x1xf32>
    %311 = vector.broadcast %310 : vector<8x1xf32> to vector<8x8xf32>
    %312 = arith.mulf %307, %311 : vector<8x8xf32>
    %cst_132 = arith.constant dense<0.000000e+00> : vector<8x16xf32>
    %313 = tpu.matmul %312, %297, %cst_132 {dimension_numbers = #tpu.dot_dimension_numbers<[1], [0], [0], [1], [0, 0, 1, 1], [], []>} : vector<8x8xf32>, vector<8x16xf32>, vector<8x16xf32> -> vector<8x16xf32>
    %314 = vector.extract_strided_slice %253 {offsets = [8, 16], sizes = [8, 16], strides = [1, 1]} : vector<16x96xf32> to vector<8x16xf32>
    %315 = vector.extract_strided_slice %253 {offsets = [8, 48], sizes = [8, 16], strides = [1, 1]} : vector<16x96xf32> to vector<8x16xf32>
    %316 = vector.extract_strided_slice %253 {offsets = [8, 80], sizes = [8, 16], strides = [1, 1]} : vector<16x96xf32> to vector<8x16xf32>
    %cst_133 = arith.constant dense<0.000000e+00> : vector<8x8xf32>
    %317 = tpu.matmul %314, %315, %cst_133 {dimension_numbers = #tpu.dot_dimension_numbers<[1], [1], [0], [0], [0, 0, 1, 0], [], []>} : vector<8x16xf32>, vector<8x16xf32>, vector<8x8xf32> -> vector<8x8xf32>
    %cst_134 = arith.constant 2.500000e-01 : f32
    %318 = vector.broadcast %cst_134 : f32 to vector<8x8xf32>
    %319 = arith.mulf %317, %318 : vector<8x8xf32>
    %320 = vector.broadcast %294 : vector<1x8xf32> to vector<8x8xf32>
    %321 = arith.addf %319, %320 : vector<8x8xf32>
    %cst_135 = arith.constant dense<0xFF800000> : vector<8xf32>
    %322 = vector.multi_reduction <maximumf>, %321, %cst_135 [1] : vector<8x8xf32> to vector<8xf32>
    %323 = vector.shape_cast %322 : vector<8xf32> to vector<8x1xf32>
    %324 = vector.broadcast %323 : vector<8x1xf32> to vector<8x8xf32>
    %325 = arith.subf %321, %324 : vector<8x8xf32>
    %326 = math.exp %325 : vector<8x8xf32>
    %cst_136 = arith.constant dense<0.000000e+00> : vector<8xf32>
    %327 = vector.multi_reduction <add>, %326, %cst_136 [1] : vector<8x8xf32> to vector<8xf32>
    %328 = vector.shape_cast %327 : vector<8xf32> to vector<8x1xf32>
    %329 = tpu.reciprocal %328 {approx = true} : vector<8x1xf32> -> vector<8x1xf32>
    %330 = vector.broadcast %329 : vector<8x1xf32> to vector<8x8xf32>
    %331 = arith.mulf %326, %330 : vector<8x8xf32>
    %cst_137 = arith.constant dense<0.000000e+00> : vector<8x16xf32>
    %332 = tpu.matmul %331, %316, %cst_137 {dimension_numbers = #tpu.dot_dimension_numbers<[1], [0], [0], [1], [0, 0, 1, 1], [], []>} : vector<8x8xf32>, vector<8x16xf32>, vector<8x16xf32> -> vector<8x16xf32>
    %333 = tpu.concatenate %313, %332 in 1 : vector<8x16xf32>, vector<8x16xf32> -> vector<8x32xf32>
    %334 = tpu.concatenate %293, %333 in 0 : vector<8x32xf32>, vector<8x32xf32> -> vector<16x32xf32>
    %c1_138 = arith.constant 1 : index
    %c0_139 = arith.constant 0 : index
    %c0_140 = arith.constant 0 : index
    %335 = vector.load %arg10[%c1_138, %c0_139, %c0_140] : memref<2x32x32xf32, #tpu.memory_space<vmem>>, vector<1x32x32xf32>
    %336 = vector.shape_cast %335 : vector<1x32x32xf32> to vector<32x32xf32>
    %cst_141 = arith.constant dense<0.000000e+00> : vector<16x32xf32>
    %337 = tpu.matmul %334, %336, %cst_141 {dimension_numbers = #tpu.dot_dimension_numbers<[1], [0], [0], [1], [0, 0, 1, 1], [], []>} : vector<16x32xf32>, vector<32x32xf32>, vector<16x32xf32> -> vector<16x32xf32>
    %c1_142 = arith.constant 1 : index
    %c0_143 = arith.constant 0 : index
    %c0_144 = arith.constant 0 : index
    %338 = vector.load %arg11[%c1_142, %c0_143, %c0_144] : memref<2x1x32xf32, #tpu.memory_space<vmem>>, vector<1x1x32xf32>
    %339 = vector.shape_cast %338 : vector<1x1x32xf32> to vector<1x32xf32>
    %340 = vector.broadcast %339 : vector<1x32xf32> to vector<16x32xf32>
    %341 = arith.addf %337, %340 : vector<16x32xf32>
    %342 = arith.addf %246, %341 : vector<16x32xf32>
    %c1_145 = arith.constant 1 : index
    %c0_146 = arith.constant 0 : index
    %c0_147 = arith.constant 0 : index
    %343 = vector.load %arg12[%c1_145, %c0_146, %c0_147] : memref<2x1x32xf32, #tpu.memory_space<vmem>>, vector<1x1x32xf32>
    %344 = vector.shape_cast %343 : vector<1x1x32xf32> to vector<1x32xf32>
    %c1_148 = arith.constant 1 : index
    %c0_149 = arith.constant 0 : index
    %c0_150 = arith.constant 0 : index
    %345 = vector.load %arg13[%c1_148, %c0_149, %c0_150] : memref<2x1x32xf32, #tpu.memory_space<vmem>>, vector<1x1x32xf32>
    %346 = vector.shape_cast %345 : vector<1x1x32xf32> to vector<1x32xf32>
    %cst_151 = arith.constant dense<0.000000e+00> : vector<16xf32>
    %347 = vector.multi_reduction <add>, %342, %cst_151 [1] : vector<16x32xf32> to vector<16xf32>
    %348 = vector.shape_cast %347 : vector<16xf32> to vector<16x1xf32>
    %cst_152 = arith.constant 3.200000e+01 : f32
    %349 = vector.broadcast %cst_152 : f32 to vector<16x1xf32>
    %350 = arith.divf %348, %349 : vector<16x1xf32>
    %351 = vector.broadcast %350 : vector<16x1xf32> to vector<16x32xf32>
    %352 = arith.subf %342, %351 : vector<16x32xf32>
    %353 = arith.mulf %352, %352 : vector<16x32xf32>
    %cst_153 = arith.constant dense<0.000000e+00> : vector<16xf32>
    %354 = vector.multi_reduction <add>, %353, %cst_153 [1] : vector<16x32xf32> to vector<16xf32>
    %355 = vector.shape_cast %354 : vector<16xf32> to vector<16x1xf32>
    %cst_154 = arith.constant 3.200000e+01 : f32
    %356 = vector.broadcast %cst_154 : f32 to vector<16x1xf32>
    %357 = arith.divf %355, %356 : vector<16x1xf32>
    %358 = vector.broadcast %350 : vector<16x1xf32> to vector<16x32xf32>
    %359 = arith.subf %342, %358 : vector<16x32xf32>
    %cst_155 = arith.constant 9.99999996E-13 : f32
    %360 = vector.broadcast %cst_155 : f32 to vector<16x1xf32>
    %361 = arith.addf %357, %360 : vector<16x1xf32>
    %362 = math.rsqrt %361 : vector<16x1xf32>
    %363 = vector.broadcast %362 : vector<16x1xf32> to vector<16x32xf32>
    %364 = arith.mulf %359, %363 : vector<16x32xf32>
    %365 = vector.broadcast %344 : vector<1x32xf32> to vector<16x32xf32>
    %366 = arith.mulf %364, %365 : vector<16x32xf32>
    %367 = vector.broadcast %346 : vector<1x32xf32> to vector<16x32xf32>
    %368 = arith.addf %366, %367 : vector<16x32xf32>
    %c1_156 = arith.constant 1 : index
    %c0_157 = arith.constant 0 : index
    %c0_158 = arith.constant 0 : index
    %369 = vector.load %arg14[%c1_156, %c0_157, %c0_158] : memref<2x32x64xf32, #tpu.memory_space<vmem>>, vector<1x32x64xf32>
    %370 = vector.shape_cast %369 : vector<1x32x64xf32> to vector<32x64xf32>
    %cst_159 = arith.constant dense<0.000000e+00> : vector<16x64xf32>
    %371 = tpu.matmul %368, %370, %cst_159 {dimension_numbers = #tpu.dot_dimension_numbers<[1], [0], [0], [1], [0, 0, 1, 1], [], []>} : vector<16x32xf32>, vector<32x64xf32>, vector<16x64xf32> -> vector<16x64xf32>
    %c1_160 = arith.constant 1 : index
    %c0_161 = arith.constant 0 : index
    %c0_162 = arith.constant 0 : index
    %372 = vector.load %arg15[%c1_160, %c0_161, %c0_162] : memref<2x1x64xf32, #tpu.memory_space<vmem>>, vector<1x1x64xf32>
    %373 = vector.shape_cast %372 : vector<1x1x64xf32> to vector<1x64xf32>
    %374 = vector.broadcast %373 : vector<1x64xf32> to vector<16x64xf32>
    %375 = arith.addf %371, %374 : vector<16x64xf32>
    %cst_163 = arith.constant 5.000000e-01 : f32
    %376 = vector.broadcast %cst_163 : f32 to vector<16x64xf32>
    %377 = arith.mulf %376, %375 : vector<16x64xf32>
    %cst_164 = arith.constant 0.707106769 : f32
    %378 = vector.broadcast %cst_164 : f32 to vector<16x64xf32>
    %379 = arith.mulf %375, %378 : vector<16x64xf32>
    %380 = math.absf %379 : vector<16x64xf32>
    %cst_165 = arith.constant 0.327591091 : f32
    %381 = vector.broadcast %cst_165 : f32 to vector<16x64xf32>
    %382 = arith.mulf %381, %380 : vector<16x64xf32>
    %cst_166 = arith.constant 1.000000e+00 : f32
    %383 = vector.broadcast %cst_166 : f32 to vector<16x64xf32>
    %384 = arith.addf %383, %382 : vector<16x64xf32>
    %cst_167 = arith.constant 1.000000e+00 : f32
    %385 = vector.broadcast %cst_167 : f32 to vector<16x64xf32>
    %386 = arith.divf %385, %384 : vector<16x64xf32>
    %cst_168 = arith.constant 1.06140542 : f32
    %387 = vector.broadcast %cst_168 : f32 to vector<16x64xf32>
    %388 = arith.mulf %387, %386 : vector<16x64xf32>
    %cst_169 = arith.constant -1.45315206 : f32
    %389 = vector.broadcast %cst_169 : f32 to vector<16x64xf32>
    %390 = arith.addf %388, %389 : vector<16x64xf32>
    %391 = arith.mulf %390, %386 : vector<16x64xf32>
    %cst_170 = arith.constant 1.42141378 : f32
    %392 = vector.broadcast %cst_170 : f32 to vector<16x64xf32>
    %393 = arith.addf %391, %392 : vector<16x64xf32>
    %394 = arith.mulf %393, %386 : vector<16x64xf32>
    %cst_171 = arith.constant -0.284496725 : f32
    %395 = vector.broadcast %cst_171 : f32 to vector<16x64xf32>
    %396 = arith.addf %394, %395 : vector<16x64xf32>
    %397 = arith.mulf %396, %386 : vector<16x64xf32>
    %cst_172 = arith.constant 0.254829586 : f32
    %398 = vector.broadcast %cst_172 : f32 to vector<16x64xf32>
    %399 = arith.addf %397, %398 : vector<16x64xf32>
    %400 = arith.mulf %399, %386 : vector<16x64xf32>
    %cst_173 = arith.constant 0.000000e+00 : f32
    %401 = vector.broadcast %cst_173 : f32 to vector<16x64xf32>
    %402 = arith.subf %401, %380 : vector<16x64xf32>
    %403 = arith.mulf %402, %380 : vector<16x64xf32>
    %404 = math.exp %403 : vector<16x64xf32>
    %405 = arith.mulf %400, %404 : vector<16x64xf32>
    %cst_174 = arith.constant 1.000000e+00 : f32
    %406 = vector.broadcast %cst_174 : f32 to vector<16x64xf32>
    %407 = arith.subf %406, %405 : vector<16x64xf32>
    %cst_175 = arith.constant 0.000000e+00 : f32
    %408 = vector.broadcast %cst_175 : f32 to vector<16x64xf32>
    %409 = arith.cmpf oge, %379, %408 : vector<16x64xf32>
    %cst_176 = arith.constant 0.000000e+00 : f32
    %410 = vector.broadcast %cst_176 : f32 to vector<16x64xf32>
    %411 = arith.subf %410, %407 : vector<16x64xf32>
    %412 = arith.select %409, %407, %411 : vector<16x64xi1>, vector<16x64xf32>
    %cst_177 = arith.constant 1.000000e+00 : f32
    %413 = vector.broadcast %cst_177 : f32 to vector<16x64xf32>
    %414 = arith.addf %413, %412 : vector<16x64xf32>
    %415 = arith.mulf %377, %414 : vector<16x64xf32>
    %c1_178 = arith.constant 1 : index
    %c0_179 = arith.constant 0 : index
    %c0_180 = arith.constant 0 : index
    %416 = vector.load %arg16[%c1_178, %c0_179, %c0_180] : memref<2x64x32xf32, #tpu.memory_space<vmem>>, vector<1x64x32xf32>
    %417 = vector.shape_cast %416 : vector<1x64x32xf32> to vector<64x32xf32>
    %cst_181 = arith.constant dense<0.000000e+00> : vector<16x32xf32>
    %418 = tpu.matmul %415, %417, %cst_181 {dimension_numbers = #tpu.dot_dimension_numbers<[1], [0], [0], [1], [0, 0, 1, 1], [], []>} : vector<16x64xf32>, vector<64x32xf32>, vector<16x32xf32> -> vector<16x32xf32>
    %c1_182 = arith.constant 1 : index
    %c0_183 = arith.constant 0 : index
    %c0_184 = arith.constant 0 : index
    %419 = vector.load %arg17[%c1_182, %c0_183, %c0_184] : memref<2x1x32xf32, #tpu.memory_space<vmem>>, vector<1x1x32xf32>
    %420 = vector.shape_cast %419 : vector<1x1x32xf32> to vector<1x32xf32>
    %421 = vector.broadcast %420 : vector<1x32xf32> to vector<16x32xf32>
    %422 = arith.addf %418, %421 : vector<16x32xf32>
    %423 = arith.addf %368, %422 : vector<16x32xf32>
    %c1_185 = arith.constant 1 : index
    %c0_186 = arith.constant 0 : index
    %c0_187 = arith.constant 0 : index
    %424 = vector.load %arg18[%c1_185, %c0_186, %c0_187] : memref<2x1x32xf32, #tpu.memory_space<vmem>>, vector<1x1x32xf32>
    %425 = vector.shape_cast %424 : vector<1x1x32xf32> to vector<1x32xf32>
    %c1_188 = arith.constant 1 : index
    %c0_189 = arith.constant 0 : index
    %c0_190 = arith.constant 0 : index
    %426 = vector.load %arg19[%c1_188, %c0_189, %c0_190] : memref<2x1x32xf32, #tpu.memory_space<vmem>>, vector<1x1x32xf32>
    %427 = vector.shape_cast %426 : vector<1x1x32xf32> to vector<1x32xf32>
    %cst_191 = arith.constant dense<0.000000e+00> : vector<16xf32>
    %428 = vector.multi_reduction <add>, %423, %cst_191 [1] : vector<16x32xf32> to vector<16xf32>
    %429 = vector.shape_cast %428 : vector<16xf32> to vector<16x1xf32>
    %cst_192 = arith.constant 3.200000e+01 : f32
    %430 = vector.broadcast %cst_192 : f32 to vector<16x1xf32>
    %431 = arith.divf %429, %430 : vector<16x1xf32>
    %432 = vector.broadcast %431 : vector<16x1xf32> to vector<16x32xf32>
    %433 = arith.subf %423, %432 : vector<16x32xf32>
    %434 = arith.mulf %433, %433 : vector<16x32xf32>
    %cst_193 = arith.constant dense<0.000000e+00> : vector<16xf32>
    %435 = vector.multi_reduction <add>, %434, %cst_193 [1] : vector<16x32xf32> to vector<16xf32>
    %436 = vector.shape_cast %435 : vector<16xf32> to vector<16x1xf32>
    %cst_194 = arith.constant 3.200000e+01 : f32
    %437 = vector.broadcast %cst_194 : f32 to vector<16x1xf32>
    %438 = arith.divf %436, %437 : vector<16x1xf32>
    %439 = vector.broadcast %431 : vector<16x1xf32> to vector<16x32xf32>
    %440 = arith.subf %423, %439 : vector<16x32xf32>
    %cst_195 = arith.constant 9.99999996E-13 : f32
    %441 = vector.broadcast %cst_195 : f32 to vector<16x1xf32>
    %442 = arith.addf %438, %441 : vector<16x1xf32>
    %443 = math.rsqrt %442 : vector<16x1xf32>
    %444 = vector.broadcast %443 : vector<16x1xf32> to vector<16x32xf32>
    %445 = arith.mulf %440, %444 : vector<16x32xf32>
    %446 = vector.broadcast %425 : vector<1x32xf32> to vector<16x32xf32>
    %447 = arith.mulf %445, %446 : vector<16x32xf32>
    %448 = vector.broadcast %427 : vector<1x32xf32> to vector<16x32xf32>
    %449 = arith.addf %447, %448 : vector<16x32xf32>
    %450 = vector.extract_strided_slice %449 {offsets = [0, 0], sizes = [1, 32], strides = [1, 1]} : vector<16x32xf32> to vector<1x32xf32>
    %451 = vector.extract_strided_slice %449 {offsets = [8, 0], sizes = [1, 32], strides = [1, 1]} : vector<16x32xf32> to vector<1x32xf32>
    %452 = tpu.concatenate %450, %451 in 0 : vector<1x32xf32>, vector<1x32xf32> -> vector<2x32xf32>
    %c0_196 = arith.constant 0 : index
    %c0_197 = arith.constant 0 : index
    %453 = vector.load %arg20[%c0_196, %c0_197] : memref<32x32xf32, #tpu.memory_space<vmem>>, vector<32x32xf32>
    %cst_198 = arith.constant dense<0.000000e+00> : vector<2x32xf32>
    %454 = tpu.matmul %452, %453, %cst_198 {dimension_numbers = #tpu.dot_dimension_numbers<[1], [0], [0], [1], [0, 0, 1, 1], [], []>} : vector<2x32xf32>, vector<32x32xf32>, vector<2x32xf32> -> vector<2x32xf32>
    %c0_199 = arith.constant 0 : index
    %c0_200 = arith.constant 0 : index
    %455 = vector.load %arg21[%c0_199, %c0_200] : memref<1x32xf32, #tpu.memory_space<vmem>>, vector<1x32xf32>
    %456 = vector.broadcast %455 : vector<1x32xf32> to vector<2x32xf32>
    %457 = arith.addf %454, %456 : vector<2x32xf32>
    %458 = math.tanh %457 : vector<2x32xf32>
    %c0_201 = arith.constant 0 : index
    %c0_202 = arith.constant 0 : index
    %459 = vector.load %arg22[%c0_201, %c0_202] : memref<32x3xf32, #tpu.memory_space<vmem>>, vector<32x3xf32>
    %cst_203 = arith.constant dense<0.000000e+00> : vector<2x3xf32>
    %460 = tpu.matmul %458, %459, %cst_203 {dimension_numbers = #tpu.dot_dimension_numbers<[1], [0], [0], [1], [0, 0, 1, 1], [], []>} : vector<2x32xf32>, vector<32x3xf32>, vector<2x3xf32> -> vector<2x3xf32>
    %c0_204 = arith.constant 0 : index
    %c0_205 = arith.constant 0 : index
    %461 = vector.load %arg23[%c0_204, %c0_205] : memref<1x3xf32, #tpu.memory_space<vmem>>, vector<1x3xf32>
    %462 = vector.broadcast %461 : vector<1x3xf32> to vector<2x3xf32>
    %463 = arith.addf %460, %462 : vector<2x3xf32>
    %c0_206 = arith.constant 0 : index
    %c0_207 = arith.constant 0 : index
    %464 = vector.load %arg24[%c0_206, %c0_207] : memref<2x3xf32, #tpu.memory_space<vmem>>, vector<2x3xf32>
    tpu.vector_store %arg24[%c0_206, %c0_207], %463 {strides = array<i32>} : memref<2x3xf32, #tpu.memory_space<vmem>>, vector<2x3xf32>,
    return
  }
}

</mosaic_0001>

<llo_original>
// kernel: bert_classifier_forward.1
$region0: #{bert_classifier_forward.1}
  #allocation0 [shape = 'u32[]', space=smem, size = 0x4, offset = 0x4, fixed_abs, tag = 'smem constant byte address 0x4 - core index']
  #allocation1 [shape = 'u32[72,128]{1,0:T(1,128)}', space=vmem, size = 0x9000, scoped, tag = 'internal scratch']
  %s0 = inlined_call_operand.vmem [shape: s32[16,1], index: 0, kind: input, shape index: {}]
  %s1 = inlined_call_operand.vmem [shape: s32[16,1], index: 1, kind: input, shape index: {}]
  %s2 = inlined_call_operand.vmem [shape: f32[2,8], index: 2, kind: input, shape index: {}]
  %s3 = inlined_call_operand.vmem [shape: f32[100,32], index: 3, kind: input, shape index: {}]
  %s4 = inlined_call_operand.vmem [shape: f32[32,32], index: 4, kind: input, shape index: {}]
  %s5 = inlined_call_operand.vmem [shape: f32[2,32], index: 5, kind: input, shape index: {}]
  %s6 = inlined_call_operand.vmem [shape: f32[1,32], index: 6, kind: input, shape index: {}]
  %s7 = inlined_call_operand.vmem [shape: f32[1,32], index: 7, kind: input, shape index: {}]
  %s8 = inlined_call_operand.vmem [shape: f32[2,32,96], index: 8, kind: input, shape index: {}]
  %s9 = inlined_call_operand.vmem [shape: f32[2,1,96], index: 9, kind: input, shape index: {}]
  %s10 = inlined_call_operand.vmem [shape: f32[2,32,32], index: 10, kind: input, shape index: {}]
  %s11 = inlined_call_operand.vmem [shape: f32[2,1,32], index: 11, kind: input, shape index: {}]
  %s12 = inlined_call_operand.vmem [shape: f32[2,1,32], index: 12, kind: input, shape index: {}]
  %s13 = inlined_call_operand.vmem [shape: f32[2,1,32], index: 13, kind: input, shape index: {}]
  %s14 = inlined_call_operand.vmem [shape: f32[2,32,64], index: 14, kind: input, shape index: {}]
  %s15 = inlined_call_operand.vmem [shape: f32[2,1,64], index: 15, kind: input, shape index: {}]
  %s16 = inlined_call_operand.vmem [shape: f32[2,64,32], index: 16, kind: input, shape index: {}]
  %s17 = inlined_call_operand.vmem [shape: f32[2,1,32], index: 17, kind: input, shape index: {}]
  %s18 = inlined_call_operand.vmem [shape: f32[2,1,32], index: 18, kind: input, shape index: {}]
  %s19 = inlined_call_operand.vmem [shape: f32[2,1,32], index: 19, kind: input, shape index: {}]
  %s20 = inlined_call_operand.vmem [shape: f32[32,32], index: 20, kind: input, shape index: {}]
  %s21 = inlined_call_operand.vmem [shape: f32[1,32], index: 21, kind: input, shape index: {}]
  %s22 = inlined_call_operand.vmem [shape: f32[32,3], index: 22, kind: input, shape index: {}]
  %s23 = inlined_call_operand.vmem [shape: f32[1,3], index: 23, kind: input, shape index: {}]
  %s24 = inlined_call_operand.hbm [shape: f32[2,3], index: 24, kind: output, shape index: {}]
  %s25 = sld [smem:[#allocation0]]
  $region106: #{bert_classifier_forward.1} parent=0
    _
  %s27 = ssub.s32 1, %s25
  %s28 = scalar_select 0, %s27, %s25
  $region1: #{bert_classifier_forward.1} parent=0
    #allocation2 [shape = 'u8[1024]{0}', space=vmem, size = 0x400, scoped, tag = 'output window, operand 0, single buffered']
    #allocation3 [shape = 's32[1]{0}', space=sflag, size = 0x4, scoped, tag = 'scoped memory for bert_classifier_forward.1']
    %29 = vsyncpa [#allocation3], 0
    // Predicated region
    $region2: #{bert_classifier_forward.1} parent=1 // pred_check
      _
    $region3: #{bert_classifier_forward.1} parent=1 // pred_check_branch
      %31 = sbr.rel (0) target = $region5
    $region4: #{bert_classifier_forward.1} parent=1 // pred_region
      _
    $region5: #{bert_classifier_forward.1} parent=1 // pred_fallthru
      _
    // Predicated region
    $region6: #{bert_classifier_forward.1} parent=1 // pred_check
      _
    $region7: #{bert_classifier_forward.1} parent=1 // pred_check_branch
      %33 = sbr.rel (0) target = $region9
    $region8: #{bert_classifier_forward.1} parent=1 // pred_region
      _
    $region9: #{bert_classifier_forward.1} parent=1 // pred_fallthru
      _
    // Predicated region
    $region10: #{bert_classifier_forward.1} parent=1 // pred_check
      _
    $region11: #{bert_classifier_forward.1} parent=1 // pred_check_branch
      %35 = sbr.rel (0) target = $region13
    $region12: #{bert_classifier_forward.1} parent=1 // pred_region
      _
    $region13: #{bert_classifier_forward.1} parent=1 // pred_fallthru
      _
    // Predicated region
    $region14: #{bert_classifier_forward.1} parent=1 // pred_check
      _
    $region15: #{bert_classifier_forward.1} parent=1 // pred_check_branch
      %37 = sbr.rel (0) target = $region17
    $region16: #{bert_classifier_forward.1} parent=1 // pred_region
      _
    $region17: #{bert_classifier_forward.1} parent=1 // pred_fallthru
      _
    // Predicated region
    $region18: #{bert_classifier_forward.1} parent=1 // pred_check
      _
    $region19: #{bert_classifier_forward.1} parent=1 // pred_check_branch
      %39 = sbr.rel (0) target = $region21
    $region20: #{bert_classifier_forward.1} parent=1 // pred_region
      _
    $region21: #{bert_classifier_forward.1} parent=1 // pred_fallthru
      _
    // Predicated region
    $region22: #{bert_classifier_forward.1} parent=1 // pred_check
      _
    $region23: #{bert_classifier_forward.1} parent=1 // pred_check_branch
      %41 = sbr.rel (0) target = $region25
    $region24: #{bert_classifier_forward.1} parent=1 // pred_region
      _
    $region25: #{bert_classifier_forward.1} parent=1 // pred_fallthru
      _
    // Predicated region
    $region26: #{bert_classifier_forward.1} parent=1 // pred_check
      _
    $region27: #{bert_classifier_forward.1} parent=1 // pred_check_branch
      %43 = sbr.rel (0) target = $region29
    $region28: #{bert_classifier_forward.1} parent=1 // pred_region
      _
    $region29: #{bert_classifier_forward.1} parent=1 // pred_fallthru
      _
    // Predicated region
    $region30: #{bert_classifier_forward.1} parent=1 // pred_check
      _
    $region31: #{bert_classifier_forward.1} parent=1 // pred_check_branch
      %45 = sbr.rel (0) target = $region33
    $region32: #{bert_classifier_forward.1} parent=1 // pred_region
      _
    $region33: #{bert_classifier_forward.1} parent=1 // pred_fallthru
      _
    // Predicated region
    $region34: #{bert_classifier_forward.1} parent=1 // pred_check
      _
    $region35: #{bert_classifier_forward.1} parent=1 // pred_check_branch
      %47 = sbr.rel (0) target = $region37
    $region36: #{bert_classifier_forward.1} parent=1 // pred_region
      _
    $region37: #{bert_classifier_forward.1} parent=1 // pred_fallthru
      _
    // Predicated region
    $region38: #{bert_classifier_forward.1} parent=1 // pred_check
      _
    $region39: #{bert_classifier_forward.1} parent=1 // pred_check_branch
      %49 = sbr.rel (0) target = $region41
    $region40: #{bert_classifier_forward.1} parent=1 // pred_region
      _
    $region41: #{bert_classifier_forward.1} parent=1 // pred_fallthru
      _
    // Predicated region
    $region42: #{bert_classifier_forward.1} parent=1 // pred_check
      _
    $region43: #{bert_classifier_forward.1} parent=1 // pred_check_branch
      %51 = sbr.rel (0) target = $region45
    $region44: #{bert_classifier_forward.1} parent=1 // pred_region
      _
    $region45: #{bert_classifier_forward.1} parent=1 // pred_fallthru
      _
    // Predicated region
    $region46: #{bert_classifier_forward.1} parent=1 // pred_check
      _
    $region47: #{bert_classifier_forward.1} parent=1 // pred_check_branch
      %53 = sbr.rel (0) target = $region49
    $region48: #{bert_classifier_forward.1} parent=1 // pred_region
      _
    $region49: #{bert_classifier_forward.1} parent=1 // pred_fallthru
      _
    // Predicated region
    $region50: #{bert_classifier_forward.1} parent=1 // pred_check
      _
    $region51: #{bert_classifier_forward.1} parent=1 // pred_check_branch
      %55 = sbr.rel (0) target = $region53
    $region52: #{bert_classifier_forward.1} parent=1 // pred_region
      _
    $region53: #{bert_classifier_forward.1} parent=1 // pred_fallthru
      _
    // Predicated region
    $region54: #{bert_classifier_forward.1} parent=1 // pred_check
      _
    $region55: #{bert_classifier_forward.1} parent=1 // pred_check_branch
      %57 = sbr.rel (0) target = $region57
    $region56: #{bert_classifier_forward.1} parent=1 // pred_region
      _
    $region57: #{bert_classifier_forward.1} parent=1 // pred_fallthru
      _
    // Predicated region
    $region58: #{bert_classifier_forward.1} parent=1 // pred_check
      _
    $region59: #{bert_classifier_forward.1} parent=1 // pred_check_branch
      %59 = sbr.rel (0) target = $region61
    $region60: #{bert_classifier_forward.1} parent=1 // pred_region
      _
    $region61: #{bert_classifier_forward.1} parent=1 // pred_fallthru
      _
    // Predicated region
    $region62: #{bert_classifier_forward.1} parent=1 // pred_check
      _
    $region63: #{bert_classifier_forward.1} parent=1 // pred_check_branch
      %61 = sbr.rel (0) target = $region65
    $region64: #{bert_classifier_forward.1} parent=1 // pred_region
      _
    $region65: #{bert_classifier_forward.1} parent=1 // pred_fallthru
      _
    // Predicated region
    $region66: #{bert_classifier_forward.1} parent=1 // pred_check
      _
    $region67: #{bert_classifier_forward.1} parent=1 // pred_check_branch
      %63 = sbr.rel (0) target = $region69
    $region68: #{bert_classifier_forward.1} parent=1 // pred_region
      _
    $region69: #{bert_classifier_forward.1} parent=1 // pred_fallthru
      _
    // Predicated region
    $region70: #{bert_classifier_forward.1} parent=1 // pred_check
      _
    $region71: #{bert_classifier_forward.1} parent=1 // pred_check_branch
      %65 = sbr.rel (0) target = $region73
    $region72: #{bert_classifier_forward.1} parent=1 // pred_region
      _
    $region73: #{bert_classifier_forward.1} parent=1 // pred_fallthru
      _
    // Predicated region
    $region74: #{bert_classifier_forward.1} parent=1 // pred_check
      _
    $region75: #{bert_classifier_forward.1} parent=1 // pred_check_branch
      %67 = sbr.rel (0) target = $region77
    $region76: #{bert_classifier_forward.1} parent=1 // pred_region
      _
    $region77: #{bert_classifier_forward.1} parent=1 // pred_fallthru
      _
    // Predicated region
    $region78: #{bert_classifier_forward.1} parent=1 // pred_check
      _
    $region79: #{bert_classifier_forward.1} parent=1 // pred_check_branch
      %69 = sbr.rel (0) target = $region81
    $region80: #{bert_classifier_forward.1} parent=1 // pred_region
      _
    $region81: #{bert_classifier_forward.1} parent=1 // pred_fallthru
      _
    // Predicated region
    $region82: #{bert_classifier_forward.1} parent=1 // pred_check
      _
    $region83: #{bert_classifier_forward.1} parent=1 // pred_check_branch
      %71 = sbr.rel (0) target = $region85
    $region84: #{bert_classifier_forward.1} parent=1 // pred_region
      _
    $region85: #{bert_classifier_forward.1} parent=1 // pred_fallthru
      _
    // Predicated region
    $region86: #{bert_classifier_forward.1} parent=1 // pred_check
      _
    $region87: #{bert_classifier_forward.1} parent=1 // pred_check_branch
      %73 = sbr.rel (0) target = $region89
    $region88: #{bert_classifier_forward.1} parent=1 // pred_region
      _
    $region89: #{bert_classifier_forward.1} parent=1 // pred_fallthru
      _
    // Predicated region
    $region90: #{bert_classifier_forward.1} parent=1 // pred_check
      _
    $region91: #{bert_classifier_forward.1} parent=1 // pred_check_branch
      %75 = sbr.rel (0) target = $region93
    $region92: #{bert_classifier_forward.1} parent=1 // pred_region
      _
    $region93: #{bert_classifier_forward.1} parent=1 // pred_fallthru
      _
    // Predicated region
    $region94: #{bert_classifier_forward.1} parent=1 // pred_check
      _
    $region95: #{bert_classifier_forward.1} parent=1 // pred_check_branch
      %77 = sbr.rel (0) target = $region97
    $region96: #{bert_classifier_forward.1} parent=1 // pred_region
      _
    $region97: #{bert_classifier_forward.1} parent=1 // pred_fallthru
      _
    %v78 = vld [vmem:[%s0] sm:$0xff]
    %v79 = vld [vmem:[%s0 + $0x8] sm:$0xff]
    %v80 = vld [vmem:[%s1] sm:$0xff]
    %v81 = vld [vmem:[%s1 + $0x8] sm:$0xff]
    %v82 = vlaneseq
    %v83 = vand.u32 %v82, 127
    %84 = vset.pattern.permute.xlu0 0
    %85 = vperm.xlu0 %84, %v78
    %v86 = vpop.permute.xlu0 %85
    %87 = vset.pattern.permute.xlu0 0
    %88 = vperm.xlu0 %87, %v79
    %v89 = vpop.permute.xlu0 %88
    %vm90 = vcmp.eq.s32.totalorder %v83, %v86
    %vm91 = vcmp.eq.s32.totalorder %v83, %v89
    %v92 = vsel %vm90, 1, 0
    %v93 = vsel %vm91, 1, 0
    %v94 = vcvt.s32.f32 %v92
    %v95 = vcvt.s32.f32 %v93
    %96 = vset.pattern.permute.xlu0 0
    %97 = vperm.xlu0 %96, %v80
    %v98 = vpop.permute.xlu0 %97
    %99 = vset.pattern.permute.xlu0 0
    %100 = vperm.xlu0 %99, %v81
    %v101 = vpop.permute.xlu0 %100
    %vm102 = vcmp.eq.s32.totalorder %v83, %v98
    %vm103 = vcmp.eq.s32.totalorder %v83, %v101
    %v104 = vsel %vm102, 1, 0
    %v105 = vsel %vm103, 1, 0
    %v106 = vcvt.s32.f32 %v104
    %v107 = vcvt.s32.f32 %v105
    %v108 = vld [vmem:[%s4] sm:$0xff]
    %v109 = vld [vmem:[%s3] sm:$0xff]
    %v110 = vld [vmem:[%s3 + $0x8] sm:$0xff]
    %v111 = vld [vmem:[%s3 + $0x10] sm:$0xff]
    %v112 = vld [vmem:[%s3 + $0x18] sm:$0xff]
    %v113 = vld [vmem:[%s3 + $0x20] sm:$0xff]
    %v114 = vld [vmem:[%s3 + $0x28] sm:$0xff]
    %v115 = vld [vmem:[%s3 + $0x30] sm:$0xff]
    %v116 = vld [vmem:[%s3 + $0x38] sm:$0xff]
    %v117 = vld [vmem:[%s3 + $0x40] sm:$0xff]
    %v118 = vld [vmem:[%s3 + $0x48] sm:$0xff]
    %v119 = vld [vmem:[%s3 + $0x50] sm:$0xff]
    %v120 = vld [vmem:[%s3 + $0x58] sm:$0xff]
    %v121 = vld [vmem:[%s3 + $0x60] sm:$0xf]
    %vm122 = vcmask 818176
    %v124 = vsel %vm122, %v94, 0
    %v127 = vsel %vm122, %v95, 0
    %vm129 = vcmask 1043456
    %v131 = vsel %vm129, %v121, 0
    %133 = vmatpush.msra.mxu0 0.0
    %134 = vmatpush.msra.mxu0 0.0
    %135 = vmatpush.msra.mxu0 0.0
    %136 = vmatpush.msra.mxu0 %v131
    %137 = vmatpush.msra.mxu0 %v120
    %138 = vmatpush.msra.mxu0 %v119
    %139 = vmatpush.msra.mxu0 %v118
    %140 = vmatpush.msra.mxu0 %v117
    %141 = vmatpush.msra.mxu0 %v116
    %142 = vmatpush.msra.mxu0 %v115
    %143 = vmatpush.msra.mxu0 %v114
    %144 = vmatpush.msra.mxu0 %v113
    %145 = vmatpush.msra.mxu0 %v112
    %146 = vmatpush.msra.mxu0 %v111
    %147 = vmatpush.msra.mxu0 %v110
    %148 = vmatpush.msra.mxu0 %v109
    %149 = vmatmul.f32.gmra.mxu0 %v124
    %v150 = vpop.f32.mrf.mxu0
    %v151 = vadd.f32 %v108, %v150
    %152 = vmatmul.f32.gmra.mxu0 %v127
    %v153 = vpop.f32.mrf.mxu0
    %v154 = vadd.f32 %v108, %v153
    %155 = vdwg.mxu0
    %v156 = vld [vmem:[%s5] sm:$0x3]
    %vm157 = vcmask 15360
    %v159 = vsel %vm157, %v106, 0
    %v162 = vsel %vm157, %v107, 0
    %vm164 = vcmask 1041408
    %v166 = vsel %vm164, %v156, 0
    %168 = vmatpush.msra.mxu0 0.0
    %169 = vmatpush.msra.mxu0 0.0
    %170 = vmatpush.msra.mxu0 0.0
    %171 = vmatpush.msra.mxu0 0.0
    %172 = vmatpush.msra.mxu0 0.0
    %173 = vmatpush.msra.mxu0 0.0
    %174 = vmatpush.msra.mxu0 0.0
    %175 = vmatpush.msra.mxu0 0.0
    %176 = vmatpush.msra.mxu0 0.0
    %177 = vmatpush.msra.mxu0 0.0
    %178 = vmatpush.msra.mxu0 0.0
    %179 = vmatpush.msra.mxu0 0.0
    %180 = vmatpush.msra.mxu0 0.0
    %181 = vmatpush.msra.mxu0 0.0
    %182 = vmatpush.msra.mxu0 0.0
    %183 = vmatpush.msra.mxu0 %v166
    %184 = vmatmul.f32.gmra.mxu0 %v159
    %v185 = vpop.f32.mrf.mxu0
    %v186 = vadd.f32 0.0, %v185
    %187 = vmatmul.f32.gmra.mxu0 %v162
    %v188 = vpop.f32.mrf.mxu0
    %v189 = vadd.f32 0.0, %v188
    %190 = vdwg.mxu0
    %v191 = vadd.f32 %v151, %v186
    %v192 = vadd.f32 %v154, %v189
    %v193 = vld [vmem:[%s6] sm:$0x1]
    %v194 = vld [vmem:[%s7] sm:$0x1]
    %vm195 = vcmask 261120
    %v196 = vsel %vm195, %v191, 0.0
    %197 = vadd.xlane.f32.xlu0 %v196
    %v198 = vpop.xlane.xlu0 %197
    %v199 = vsel %vm195, %v192, 0.0
    %200 = vadd.xlane.f32.xlu0 %v199
    %v201 = vpop.xlane.xlu0 %200
    %v202 = vrcp.pop 32.0
    %v203 = vmul.f32 32.0, %v202
    %v204 = vsub.f32 1.0, %v203
    %v205 = vmul.f32 %v202, %v204
    %v206 = vadd.f32 %v202, %v205
    %vm207 = vweird.f32 %v202
    %v208 = vsel %vm207, %v202, %v206
    %v209 = vmul.f32 %v198, %v208
    %v210 = vmul.f32 %v201, %v208
    %v211 = vsub.f32 %v191, %v209
    %v212 = vsub.f32 %v192, %v210
    %v213 = vmul.f32 %v211, %v211
    %v214 = vmul.f32 %v212, %v212
    %v215 = vsel %vm195, %v213, 0.0
    %216 = vadd.xlane.f32.xlu0 %v215
    %v217 = vpop.xlane.xlu0 %216
    %v218 = vsel %vm195, %v214, 0.0
    %219 = vadd.xlane.f32.xlu0 %v218
    %v220 = vpop.xlane.xlu0 %219
    %v221 = vmul.f32 %v217, %v208
    %v222 = vmul.f32 %v220, %v208
    %v223 = vadd.f32 %v221, 1e-12
    %v224 = vadd.f32 %v222, 1e-12
    %v225 = vrsqrt.pop %v223
    %v226 = vmul.f32 %v225, %v223
    %v227 = vmul.f32 %v226, %v225
    %v228 = vmul.f32 0.5, %v227
    %v229 = vsub.f32 1.5, %v228
    %v230 = vmul.f32 %v225, %v229
    %vm231 = vweird.f32 %v223
    %vm232 = vweird.f32 %v225
    %vm233 = vmor %vm231, %vm232
    %v234 = vsel %vm233, %v225, %v230
    %v235 = vrsqrt.pop %v224
    %v236 = vmul.f32 %v235, %v224
    %v237 = vmul.f32 %v236, %v235
    %v238 = vmul.f32 0.5, %v237
    %v239 = vsub.f32 1.5, %v238
    %v240 = vmul.f32 %v235, %v239
    %vm241 = vweird.f32 %v224
    %vm242 = vweird.f32 %v235
    %vm243 = vmor %vm241, %vm242
    %v244 = vsel %vm243, %v235, %v240
    %v245 = vmul.f32 %v211, %v234
    %v246 = vmul.f32 %v212, %v244
    %v248 = vperm.slane %v193, 0
    %v250 = vmul.f32 %v245, %v248
    %v251 = vmul.f32 %v246, %v248
    %v253 = vperm.slane %v194, 0
    %v255 = vadd.f32 %v250, %v253
    %v256 = vadd.f32 %v251, %v253
    %v257 = vld [vmem:[%s8] sm:$0xff]
    %v258 = vld [vmem:[%s8 + $0x8] sm:$0xff]
    %v259 = vld [vmem:[%s8 + $0x10] sm:$0xff]
    %v260 = vld [vmem:[%s8 + $0x18] sm:$0xff]
    %v261 = vld [vmem:[%s9] sm:$0x1]
    %v263 = vperm.slane %v261, 0
    %v266 = vsel %vm195, %v255, 0
    %v269 = vsel %vm195, %v256, 0
    %271 = vmatpush.msra.mxu0 0.0
    %272 = vmatpush.msra.mxu0 0.0
    %273 = vmatpush.msra.mxu0 0.0
    %274 = vmatpush.msra.mxu0 0.0
    %275 = vmatpush.msra.mxu0 0.0
    %276 = vmatpush.msra.mxu0 0.0
    %277 = vmatpush.msra.mxu0 0.0
    %278 = vmatpush.msra.mxu0 0.0
    %279 = vmatpush.msra.mxu0 0.0
    %280 = vmatpush.msra.mxu0 0.0
    %281 = vmatpush.msra.mxu0 0.0
    %282 = vmatpush.msra.mxu0 0.0
    %283 = vmatpush.msra.mxu0 %v260
    %284 = vmatpush.msra.mxu0 %v259
    %285 = vmatpush.msra.mxu0 %v258
    %286 = vmatpush.msra.mxu0 %v257
    %287 = vmatmul.f32.gmra.mxu0 %v266
    %v288 = vpop.f32.mrf.mxu0
    %v289 = vadd.f32 %v263, %v288
    %290 = vmatmul.f32.gmra.mxu0 %v269
    %v291 = vpop.f32.mrf.mxu0
    %v292 = vadd.f32 %v263, %v291
    %293 = vdwg.mxu0
    %v294 = vld [vmem:[%s2] sm:$0x1]
    %296 = vrot.lane.b32.xlu0 %v289, 96
    %v297 = vpop.permute.xlu0 %296
    %vm298 = vcmask 130048
    %v299 = vsel %vm298, %v289, 0
    %v301 = vsel %vm298, %v297, 0
    %303 = vmatpush.xpose.msra.mxu0 0.0
    %304 = vmatpush.xpose.msra.mxu0 0.0
    %305 = vmatpush.xpose.msra.mxu0 0.0
    %306 = vmatpush.xpose.msra.mxu0 0.0
    %307 = vmatpush.xpose.msra.mxu0 0.0
    %308 = vmatpush.xpose.msra.mxu0 0.0
    %309 = vmatpush.xpose.msra.mxu0 0.0
    %310 = vmatpush.xpose.msra.mxu0 0.0
    %311 = vmatpush.xpose.msra.mxu0 0.0
    %312 = vmatpush.xpose.msra.mxu0 0.0
    %313 = vmatpush.xpose.msra.mxu0 0.0
    %314 = vmatpush.xpose.msra.mxu0 0.0
    %315 = vmatpush.xpose.msra.mxu0 0.0
    %316 = vmatpush.xpose.msra.mxu0 0.0
    %317 = vmatpush.xpose.msra.mxu0 0.0
    %318 = vmatpush.xpose.msra.mxu0 %v301
    %319 = vmatmul.f32.gmra.mxu0 %v299
    %v320 = vpop.f32.mrf.mxu0
    %v321 = vadd.f32 0.0, %v320
    %322 = vdwg.mxu0
    %v323 = vmul.f32 %v321, 0.25
    %v324 = vperm.slane %v294, 0
    %v325 = vadd.f32 %v323, %v324
    %vm326 = vcmask 64512
    %v327 = vsel %vm326, %v325, -inf
    %328 = vmax.xlane.f32.xlu0 %v327
    %v329 = vpop.xlane.xlu0 %328
    %v330 = vsub.f32 %v325, %v329
    %v331 = vmul.f32 %v330, 1.442695
    %v332 = vpow.pop %v331
    %v333 = vsel %vm326, %v332, 0.0
    %334 = vadd.xlane.f32.xlu0 %v333
    %v335 = vpop.xlane.xlu0 %334
    %v336 = vrcp.pop %v335
    %v337 = vmul.f32 %v332, %v336
    %338 = vrot.lane.b32.xlu0 %v289, 64
    %v339 = vpop.permute.xlu0 %338
    %v342 = vsel %vm326, %v337, 0
    %344 = vmatpush.msra.mxu0 0.0
    %345 = vmatpush.msra.mxu0 0.0
    %346 = vmatpush.msra.mxu0 0.0
    %347 = vmatpush.msra.mxu0 0.0
    %348 = vmatpush.msra.mxu0 0.0
    %349 = vmatpush.msra.mxu0 0.0
    %350 = vmatpush.msra.mxu0 0.0
    %351 = vmatpush.msra.mxu0 0.0
    %352 = vmatpush.msra.mxu0 0.0
    %353 = vmatpush.msra.mxu0 0.0
    %354 = vmatpush.msra.mxu0 0.0
    %355 = vmatpush.msra.mxu0 0.0
    %356 = vmatpush.msra.mxu0 0.0
    %357 = vmatpush.msra.mxu0 0.0
    %358 = vmatpush.msra.mxu0 0.0
    %359 = vmatpush.msra.mxu0 %v339
    %360 = vmatmul.f32.gmra.mxu0 %v342
    %v361 = vpop.f32.mrf.mxu0
    %v362 = vadd.f32 0.0, %v361
    %363 = vdwg.mxu0
    %364 = vrot.lane.b32.xlu0 %v289, 112
    %v365 = vpop.permute.xlu0 %364
    %366 = vrot.lane.b32.xlu0 %v289, 80
    %v367 = vpop.permute.xlu0 %366
    %v368 = vsel %vm298, %v365, 0
    %v370 = vsel %vm298, %v367, 0
    %372 = vmatpush.xpose.msra.mxu0 0.0
    %373 = vmatpush.xpose.msra.mxu0 0.0
    %374 = vmatpush.xpose.msra.mxu0 0.0
    %375 = vmatpush.xpose.msra.mxu0 0.0
    %376 = vmatpush.xpose.msra.mxu0 0.0
    %377 = vmatpush.xpose.msra.mxu0 0.0
    %378 = vmatpush.xpose.msra.mxu0 0.0
    %379 = vmatpush.xpose.msra.mxu0 0.0
    %380 = vmatpush.xpose.msra.mxu0 0.0
    %381 = vmatpush.xpose.msra.mxu0 0.0
    %382 = vmatpush.xpose.msra.mxu0 0.0
    %383 = vmatpush.xpose.msra.mxu0 0.0
    %384 = vmatpush.xpose.msra.mxu0 0.0
    %385 = vmatpush.xpose.msra.mxu0 0.0
    %386 = vmatpush.xpose.msra.mxu0 0.0
    %387 = vmatpush.xpose.msra.mxu0 %v370
    %388 = vmatmul.f32.gmra.mxu0 %v368
    %v389 = vpop.f32.mrf.mxu0
    %v390 = vadd.f32 0.0, %v389
    %391 = vdwg.mxu0
    %v392 = vmul.f32 %v390, 0.25
    %v393 = vadd.f32 %v392, %v324
    %v394 = vsel %vm326, %v393, -inf
    %395 = vmax.xlane.f32.xlu0 %v394
    %v396 = vpop.xlane.xlu0 %395
    %v397 = vsub.f32 %v393, %v396
    %v398 = vmul.f32 %v397, 1.442695
    %v399 = vpow.pop %v398
    %v400 = vsel %vm326, %v399, 0.0
    %401 = vadd.xlane.f32.xlu0 %v400
    %v402 = vpop.xlane.xlu0 %401
    %v403 = vrcp.pop %v402
    %v404 = vmul.f32 %v399, %v403
    %405 = vrot.lane.b32.xlu0 %v289, 48
    %v406 = vpop.permute.xlu0 %405
    %v409 = vsel %vm326, %v404, 0
    %411 = vmatpush.msra.mxu0 0.0
    %412 = vmatpush.msra.mxu0 0.0
    %413 = vmatpush.msra.mxu0 0.0
    %414 = vmatpush.msra.mxu0 0.0
    %415 = vmatpush.msra.mxu0 0.0
    %416 = vmatpush.msra.mxu0 0.0
    %417 = vmatpush.msra.mxu0 0.0
    %418 = vmatpush.msra.mxu0 0.0
    %419 = vmatpush.msra.mxu0 0.0
    %420 = vmatpush.msra.mxu0 0.0
    %421 = vmatpush.msra.mxu0 0.0
    %422 = vmatpush.msra.mxu0 0.0
    %423 = vmatpush.msra.mxu0 0.0
    %424 = vmatpush.msra.mxu0 0.0
    %425 = vmatpush.msra.mxu0 0.0
    %426 = vmatpush.msra.mxu0 %v406
    %427 = vmatmul.f32.gmra.mxu0 %v409
    %v428 = vpop.f32.mrf.mxu0
    %v429 = vadd.f32 0.0, %v428
    %430 = vdwg.mxu0
    %432 = vrot.lane.b32.xlu0 %v429, 16
    %v433 = vpop.permute.xlu0 %432
    %v435 = vsel %vm298, %v362, %v433
    %v436 = vld [vmem:[%s2 + $0x1] sm:$0x1]
    %438 = vrot.lane.b32.xlu0 %v292, 96
    %v439 = vpop.permute.xlu0 %438
    %v440 = vsel %vm298, %v292, 0
    %v442 = vsel %vm298, %v439, 0
    %444 = vmatpush.xpose.msra.mxu0 0.0
    %445 = vmatpush.xpose.msra.mxu0 0.0
    %446 = vmatpush.xpose.msra.mxu0 0.0
    %447 = vmatpush.xpose.msra.mxu0 0.0
    %448 = vmatpush.xpose.msra.mxu0 0.0
    %449 = vmatpush.xpose.msra.mxu0 0.0
    %450 = vmatpush.xpose.msra.mxu0 0.0
    %451 = vmatpush.xpose.msra.mxu0 0.0
    %452 = vmatpush.xpose.msra.mxu0 0.0
    %453 = vmatpush.xpose.msra.mxu0 0.0
    %454 = vmatpush.xpose.msra.mxu0 0.0
    %455 = vmatpush.xpose.msra.mxu0 0.0
    %456 = vmatpush.xpose.msra.mxu0 0.0
    %457 = vmatpush.xpose.msra.mxu0 0.0
    %458 = vmatpush.xpose.msra.mxu0 0.0
    %459 = vmatpush.xpose.msra.mxu0 %v442
    %460 = vmatmul.f32.gmra.mxu0 %v440
    %v461 = vpop.f32.mrf.mxu0
    %v462 = vadd.f32 0.0, %v461
    %463 = vdwg.mxu0
    %v464 = vmul.f32 %v462, 0.25
    %v465 = vperm.slane %v436, 0
    %v466 = vadd.f32 %v464, %v465
    %v467 = vsel %vm326, %v466, -inf
    %468 = vmax.xlane.f32.xlu0 %v467
    %v469 = vpop.xlane.xlu0 %468
    %v470 = vsub.f32 %v466, %v469
    %v471 = vmul.f32 %v470, 1.442695
    %v472 = vpow.pop %v471
    %v473 = vsel %vm326, %v472, 0.0
    %474 = vadd.xlane.f32.xlu0 %v473
    %v475 = vpop.xlane.xlu0 %474
    %v476 = vrcp.pop %v475
    %v477 = vmul.f32 %v472, %v476
    %478 = vrot.lane.b32.xlu0 %v292, 64
    %v479 = vpop.permute.xlu0 %478
    %v482 = vsel %vm326, %v477, 0
    %484 = vmatpush.msra.mxu0 0.0
    %485 = vmatpush.msra.mxu0 0.0
    %486 = vmatpush.msra.mxu0 0.0
    %487 = vmatpush.msra.mxu0 0.0
    %488 = vmatpush.msra.mxu0 0.0
    %489 = vmatpush.msra.mxu0 0.0
    %490 = vmatpush.msra.mxu0 0.0
    %491 = vmatpush.msra.mxu0 0.0
    %492 = vmatpush.msra.mxu0 0.0
    %493 = vmatpush.msra.mxu0 0.0
    %494 = vmatpush.msra.mxu0 0.0
    %495 = vmatpush.msra.mxu0 0.0
    %496 = vmatpush.msra.mxu0 0.0
    %497 = vmatpush.msra.mxu0 0.0
    %498 = vmatpush.msra.mxu0 0.0
    %499 = vmatpush.msra.mxu0 %v479
    %500 = vmatmul.f32.gmra.mxu0 %v482
    %v501 = vpop.f32.mrf.mxu0
    %v502 = vadd.f32 0.0, %v501
    %503 = vdwg.mxu0
    %504 = vrot.lane.b32.xlu0 %v292, 112
    %v505 = vpop.permute.xlu0 %504
    %506 = vrot.lane.b32.xlu0 %v292, 80
    %v507 = vpop.permute.xlu0 %506
    %v508 = vsel %vm298, %v505, 0
    %v510 = vsel %vm298, %v507, 0
    %512 = vmatpush.xpose.msra.mxu0 0.0
    %513 = vmatpush.xpose.msra.mxu0 0.0
    %514 = vmatpush.xpose.msra.mxu0 0.0
    %515 = vmatpush.xpose.msra.mxu0 0.0
    %516 = vmatpush.xpose.msra.mxu0 0.0
    %517 = vmatpush.xpose.msra.mxu0 0.0
    %518 = vmatpush.xpose.msra.mxu0 0.0
    %519 = vmatpush.xpose.msra.mxu0 0.0
    %520 = vmatpush.xpose.msra.mxu0 0.0
    %521 = vmatpush.xpose.msra.mxu0 0.0
    %522 = vmatpush.xpose.msra.mxu0 0.0
    %523 = vmatpush.xpose.msra.mxu0 0.0
    %524 = vmatpush.xpose.msra.mxu0 0.0
    %525 = vmatpush.xpose.msra.mxu0 0.0
    %526 = vmatpush.xpose.msra.mxu0 0.0
    %527 = vmatpush.xpose.msra.mxu0 %v510
    %528 = vmatmul.f32.gmra.mxu0 %v508
    %v529 = vpop.f32.mrf.mxu0
    %v530 = vadd.f32 0.0, %v529
    %531 = vdwg.mxu0
    %v532 = vmul.f32 %v530, 0.25
    %v533 = vadd.f32 %v532, %v465
    %v534 = vsel %vm326, %v533, -inf
    %535 = vmax.xlane.f32.xlu0 %v534
    %v536 = vpop.xlane.xlu0 %535
    %v537 = vsub.f32 %v533, %v536
    %v538 = vmul.f32 %v537, 1.442695
    %v539 = vpow.pop %v538
    %v540 = vsel %vm326, %v539, 0.0
    %541 = vadd.xlane.f32.xlu0 %v540
    %v542 = vpop.xlane.xlu0 %541
    %v543 = vrcp.pop %v542
    %v544 = vmul.f32 %v539, %v543
    %545 = vrot.lane.b32.xlu0 %v292, 48
    %v546 = vpop.permute.xlu0 %545
    %v549 = vsel %vm326, %v544, 0
    %551 = vmatpush.msra.mxu0 0.0
    %552 = vmatpush.msra.mxu0 0.0
    %553 = vmatpush.msra.mxu0 0.0
    %554 = vmatpush.msra.mxu0 0.0
    %555 = vmatpush.msra.mxu0 0.0
    %556 = vmatpush.msra.mxu0 0.0
    %557 = vmatpush.msra.mxu0 0.0
    %558 = vmatpush.msra.mxu0 0.0
    %559 = vmatpush.msra.mxu0 0.0
    %560 = vmatpush.msra.mxu0 0.0
    %561 = vmatpush.msra.mxu0 0.0
    %562 = vmatpush.msra.mxu0 0.0
    %563 = vmatpush.msra.mxu0 0.0
    %564 = vmatpush.msra.mxu0 0.0
    %565 = vmatpush.msra.mxu0 0.0
    %566 = vmatpush.msra.mxu0 %v546
    %567 = vmatmul.f32.gmra.mxu0 %v549
    %v568 = vpop.f32.mrf.mxu0
    %v569 = vadd.f32 0.0, %v568
    %570 = vdwg.mxu0
    %572 = vrot.lane.b32.xlu0 %v569, 16
    %v573 = vpop.permute.xlu0 %572
    %v575 = vsel %vm298, %v502, %v573
    %v576 = vld [vmem:[%s10] sm:$0xff]
    %v577 = vld [vmem:[%s10 + $0x8] sm:$0xff]
    %v578 = vld [vmem:[%s10 + $0x10] sm:$0xff]
    %v579 = vld [vmem:[%s10 + $0x18] sm:$0xff]
    %v580 = vld [vmem:[%s11] sm:$0x1]
    %v582 = vperm.slane %v580, 0
    %v585 = vsel %vm195, %v435, 0
    %v588 = vsel %vm195, %v575, 0
    %590 = vmatpush.msra.mxu0 0.0
    %591 = vmatpush.msra.mxu0 0.0
    %592 = vmatpush.msra.mxu0 0.0
    %593 = vmatpush.msra.mxu0 0.0
    %594 = vmatpush.msra.mxu0 0.0
    %595 = vmatpush.msra.mxu0 0.0
    %596 = vmatpush.msra.mxu0 0.0
    %597 = vmatpush.msra.mxu0 0.0
    %598 = vmatpush.msra.mxu0 0.0
    %599 = vmatpush.msra.mxu0 0.0
    %600 = vmatpush.msra.mxu0 0.0
    %601 = vmatpush.msra.mxu0 0.0
    %602 = vmatpush.msra.mxu0 %v579
    %603 = vmatpush.msra.mxu0 %v578
    %604 = vmatpush.msra.mxu0 %v577
    %605 = vmatpush.msra.mxu0 %v576
    %606 = vmatmul.f32.gmra.mxu0 %v585
    %v607 = vpop.f32.mrf.mxu0
    %v608 = vadd.f32 %v582, %v607
    %609 = vmatmul.f32.gmra.mxu0 %v588
    %v610 = vpop.f32.mrf.mxu0
    %v611 = vadd.f32 %v582, %v610
    %612 = vdwg.mxu0
    %v613 = vadd.f32 %v255, %v608
    %v614 = vadd.f32 %v256, %v611
    %v615 = vld [vmem:[%s12] sm:$0x1]
    %v616 = vld [vmem:[%s13] sm:$0x1]
    %v617 = vsel %vm195, %v613, 0.0
    %618 = vadd.xlane.f32.xlu0 %v617
    %v619 = vpop.xlane.xlu0 %618
    %v620 = vsel %vm195, %v614, 0.0
    %621 = vadd.xlane.f32.xlu0 %v620
    %v622 = vpop.xlane.xlu0 %621
    %v623 = vmul.f32 %v619, %v208
    %v624 = vmul.f32 %v622, %v208
    %v625 = vsub.f32 %v613, %v623
    %v626 = vsub.f32 %v614, %v624
    %v627 = vmul.f32 %v625, %v625
    %v628 = vmul.f32 %v626, %v626
    %v629 = vsel %vm195, %v627, 0.0
    %630 = vadd.xlane.f32.xlu0 %v629
    %v631 = vpop.xlane.xlu0 %630
    %v632 = vsel %vm195, %v628, 0.0
    %633 = vadd.xlane.f32.xlu0 %v632
    %v634 = vpop.xlane.xlu0 %633
    %v635 = vmul.f32 %v631, %v208
    %v636 = vmul.f32 %v634, %v208
    %v637 = vadd.f32 %v635, 1e-12
    %v638 = vadd.f32 %v636, 1e-12
    %v639 = vrsqrt.pop %v637
    %v640 = vmul.f32 %v639, %v637
    %v641 = vmul.f32 %v640, %v639
    %v642 = vmul.f32 0.5, %v641
    %v643 = vsub.f32 1.5, %v642
    %v644 = vmul.f32 %v639, %v643
    %vm645 = vweird.f32 %v637
    %vm646 = vweird.f32 %v639
    %vm647 = vmor %vm645, %vm646
    %v648 = vsel %vm647, %v639, %v644
    %v649 = vrsqrt.pop %v638
    %v650 = vmul.f32 %v649, %v638
    %v651 = vmul.f32 %v650, %v649
    %v652 = vmul.f32 0.5, %v651
    %v653 = vsub.f32 1.5, %v652
    %v654 = vmul.f32 %v649, %v653
    %vm655 = vweird.f32 %v638
    %vm656 = vweird.f32 %v649
    %vm657 = vmor %vm655, %vm656
    %v658 = vsel %vm657, %v649, %v654
    %v659 = vmul.f32 %v625, %v648
    %v660 = vmul.f32 %v626, %v658
    %v662 = vperm.slane %v615, 0
    %v664 = vmul.f32 %v659, %v662
    %v665 = vmul.f32 %v660, %v662
    %v667 = vperm.slane %v616, 0
    %v669 = vadd.f32 %v664, %v667
    %v670 = vadd.f32 %v665, %v667
    %v671 = vld [vmem:[%s14] sm:$0xff]
    %v672 = vld [vmem:[%s14 + $0x8] sm:$0xff]
    %v673 = vld [vmem:[%s14 + $0x10] sm:$0xff]
    %v674 = vld [vmem:[%s14 + $0x18] sm:$0xff]
    %v675 = vld [vmem:[%s15] sm:$0x1]
    %v677 = vperm.slane %v675, 0
    %v680 = vsel %vm195, %v669, 0
    %v683 = vsel %vm195, %v670, 0
    %685 = vmatpush.msra.mxu0 0.0
    %686 = vmatpush.msra.mxu0 0.0
    %687 = vmatpush.msra.mxu0 0.0
    %688 = vmatpush.msra.mxu0 0.0
    %689 = vmatpush.msra.mxu0 0.0
    %690 = vmatpush.msra.mxu0 0.0
    %691 = vmatpush.msra.mxu0 0.0
    %692 = vmatpush.msra.mxu0 0.0
    %693 = vmatpush.msra.mxu0 0.0
    %694 = vmatpush.msra.mxu0 0.0
    %695 = vmatpush.msra.mxu0 0.0
    %696 = vmatpush.msra.mxu0 0.0
    %697 = vmatpush.msra.mxu0 %v674
    %698 = vmatpush.msra.mxu0 %v673
    %699 = vmatpush.msra.mxu0 %v672
    %700 = vmatpush.msra.mxu0 %v671
    %701 = vmatmul.f32.gmra.mxu0 %v680
    %v702 = vpop.f32.mrf.mxu0
    %v703 = vadd.f32 %v677, %v702
    %704 = vmatmul.f32.gmra.mxu0 %v683
    %v705 = vpop.f32.mrf.mxu0
    %v706 = vadd.f32 %v677, %v705
    %707 = vdwg.mxu0
    %v708 = vmul.f32 %v703, 0.5
    %v709 = vmul.f32 %v706, 0.5
    %v710 = vmul.f32 %v703, 0.70710677
    %v711 = vmul.f32 %v706, 0.70710677
    %v712 = vand.u32 2147483647, %v710
    %v713 = vand.u32 2147483647, %v711
    %v714 = vmul.f32 %v712, 0.3275911
    %v715 = vmul.f32 %v713, 0.3275911
    %v716 = vadd.f32 %v714, 1.0
    %v717 = vadd.f32 %v715, 1.0
    %v718 = vrcp.pop %v716
    %v719 = vmul.f32 %v716, %v718
    %v720 = vsub.f32 1.0, %v719
    %v721 = vmul.f32 %v718, %v720
    %v722 = vadd.f32 %v718, %v721
    %vm723 = vweird.f32 %v716
    %vm724 = vweird.f32 %v718
    %vm725 = vmor %vm723, %vm724
    %v726 = vsel %vm725, %v718, %v722
    %v727 = vand.u32 2147483647, %v716
    %vm728 = vcmp.eq.f32.partialorder %v727, 8.507059e+37
    %v729 = vand.u32 %v716, 2147483648
    %v730 = vor.u32 1.1754944e-38, %v729
    %v731 = vsel %vm728, %v730, %v726
    %v732 = vmul.f32 1.0, %v731
    %v733 = vrcp.pop %v717
    %v734 = vmul.f32 %v717, %v733
    %v735 = vsub.f32 1.0, %v734
    %v736 = vmul.f32 %v733, %v735
    %v737 = vadd.f32 %v733, %v736
    %vm738 = vweird.f32 %v717
    %vm739 = vweird.f32 %v733
    %vm740 = vmor %vm738, %vm739
    %v741 = vsel %vm740, %v733, %v737
    %v742 = vand.u32 2147483647, %v717
    %vm743 = vcmp.eq.f32.partialorder %v742, 8.507059e+37
    %v744 = vand.u32 %v717, 2147483648
    %v745 = vor.u32 1.1754944e-38, %v744
    %v746 = vsel %vm743, %v745, %v741
    %v747 = vmul.f32 1.0, %v746
    %v748 = vmul.f32 %v732, 1.0614054
    %v749 = vmul.f32 %v747, 1.0614054
    %v750 = vadd.f32 %v748, -1.4531521
    %v751 = vadd.f32 %v749, -1.4531521
    %v752 = vmul.f32 %v750, %v732
    %v753 = vmul.f32 %v751, %v747
    %v754 = vadd.f32 %v752, 1.4214138
    %v755 = vadd.f32 %v753, 1.4214138
    %v756 = vmul.f32 %v754, %v732
    %v757 = vmul.f32 %v755, %v747
    %v758 = vadd.f32 %v756, -0.28449672
    %v759 = vadd.f32 %v757, -0.28449672
    %v760 = vmul.f32 %v758, %v732
    %v761 = vmul.f32 %v759, %v747
    %v762 = vadd.f32 %v760, 0.2548296
    %v763 = vadd.f32 %v761, 0.2548296
    %v764 = vmul.f32 %v762, %v732
    %v765 = vmul.f32 %v763, %v747
    %v766 = vsub.f32 0.0, %v712
    %v767 = vsub.f32 0.0, %v713
    %v768 = vmul.f32 %v766, %v712
    %v769 = vmul.f32 %v767, %v713
    %v770 = vmul.f32 %v768, 1.442695
    %v771 = vpow.pop %v770
    %v772 = vmul.f32 %v769, 1.442695
    %v773 = vpow.pop %v772
    %v774 = vmul.f32 %v764, %v771
    %v775 = vmul.f32 %v765, %v773
    %v776 = vsub.f32 1.0, %v774
    %v777 = vsub.f32 1.0, %v775
    %vm778 = vcmp.ge.f32.partialorder %v710, 0.0
    %vm779 = vcmp.ge.f32.partialorder %v711, 0.0
    %v780 = vsub.f32 0.0, %v776
    %v781 = vsub.f32 0.0, %v777
    %v782 = vsel %vm778, %v776, %v780
    %v783 = vsel %vm779, %v777, %v781
    %v784 = vadd.f32 %v782, 1.0
    %v785 = vadd.f32 %v783, 1.0
    %v786 = vmul.f32 %v708, %v784
    %v787 = vmul.f32 %v709, %v785
    %v788 = vld [vmem:[%s16] sm:$0xff]
    %v789 = vld [vmem:[%s16 + $0x8] sm:$0xff]
    %v790 = vld [vmem:[%s16 + $0x10] sm:$0xff]
    %v791 = vld [vmem:[%s16 + $0x18] sm:$0xff]
    %v792 = vld [vmem:[%s16 + $0x20] sm:$0xff]
    %v793 = vld [vmem:[%s16 + $0x28] sm:$0xff]
    %v794 = vld [vmem:[%s16 + $0x30] sm:$0xff]
    %v795 = vld [vmem:[%s16 + $0x38] sm:$0xff]
    %v796 = vld [vmem:[%s17] sm:$0x1]
    %v798 = vperm.slane %v796, 0
    %vm800 = vcmask 523264
    %v802 = vsel %vm800, %v786, 0
    %v805 = vsel %vm800, %v787, 0
    %807 = vmatpush.msra.mxu0 0.0
    %808 = vmatpush.msra.mxu0 0.0
    %809 = vmatpush.msra.mxu0 0.0
    %810 = vmatpush.msra.mxu0 0.0
    %811 = vmatpush.msra.mxu0 0.0
    %812 = vmatpush.msra.mxu0 0.0
    %813 = vmatpush.msra.mxu0 0.0
    %814 = vmatpush.msra.mxu0 0.0
    %815 = vmatpush.msra.mxu0 %v795
    %816 = vmatpush.msra.mxu0 %v794
    %817 = vmatpush.msra.mxu0 %v793
    %818 = vmatpush.msra.mxu0 %v792
    %819 = vmatpush.msra.mxu0 %v791
    %820 = vmatpush.msra.mxu0 %v790
    %821 = vmatpush.msra.mxu0 %v789
    %822 = vmatpush.msra.mxu0 %v788
    %823 = vmatmul.f32.gmra.mxu0 %v802
    %v824 = vpop.f32.mrf.mxu0
    %v825 = vadd.f32 %v798, %v824
    %826 = vmatmul.f32.gmra.mxu0 %v805
    %v827 = vpop.f32.mrf.mxu0
    %v828 = vadd.f32 %v798, %v827
    %829 = vdwg.mxu0
    %v830 = vadd.f32 %v669, %v825
    %v831 = vadd.f32 %v670, %v828
    %v832 = vld [vmem:[%s18] sm:$0x1]
    %v833 = vld [vmem:[%s19] sm:$0x1]
    %v834 = vsel %vm195, %v830, 0.0
    %835 = vadd.xlane.f32.xlu0 %v834
    %v836 = vpop.xlane.xlu0 %835
    %v837 = vsel %vm195, %v831, 0.0
    %838 = vadd.xlane.f32.xlu0 %v837
    %v839 = vpop.xlane.xlu0 %838
    %v840 = vmul.f32 %v836, %v208
    %v841 = vmul.f32 %v839, %v208
    %v842 = vsub.f32 %v830, %v840
    %v843 = vsub.f32 %v831, %v841
    %v844 = vmul.f32 %v842, %v842
    %v845 = vmul.f32 %v843, %v843
    %v846 = vsel %vm195, %v844, 0.0
    %847 = vadd.xlane.f32.xlu0 %v846
    %v848 = vpop.xlane.xlu0 %847
    %v849 = vsel %vm195, %v845, 0.0
    %850 = vadd.xlane.f32.xlu0 %v849
    %v851 = vpop.xlane.xlu0 %850
    %v852 = vmul.f32 %v848, %v208
    %v853 = vmul.f32 %v851, %v208
    %v854 = vadd.f32 %v852, 1e-12
    %v855 = vadd.f32 %v853, 1e-12
    %v856 = vrsqrt.pop %v854
    %v857 = vmul.f32 %v856, %v854
    %v858 = vmul.f32 %v857, %v856
    %v859 = vmul.f32 0.5, %v858
    %v860 = vsub.f32 1.5, %v859
    %v861 = vmul.f32 %v856, %v860
    %vm862 = vweird.f32 %v854
    %vm863 = vweird.f32 %v856
    %vm864 = vmor %vm862, %vm863
    %v865 = vsel %vm864, %v856, %v861
    %v866 = vrsqrt.pop %v855
    %v867 = vmul.f32 %v866, %v855
    %v868 = vmul.f32 %v867, %v866
    %v869 = vmul.f32 0.5, %v868
    %v870 = vsub.f32 1.5, %v869
    %v871 = vmul.f32 %v866, %v870
    %vm872 = vweird.f32 %v855
    %vm873 = vweird.f32 %v866
    %vm874 = vmor %vm872, %vm873
    %v875 = vsel %vm874, %v866, %v871
    %v876 = vmul.f32 %v842, %v865
    %v877 = vmul.f32 %v843, %v875
    %v879 = vperm.slane %v832, 0
    %v881 = vmul.f32 %v876, %v879
    %v882 = vmul.f32 %v877, %v879
    %v884 = vperm.slane %v833, 0
    %v886 = vadd.f32 %v881, %v884
    %v887 = vadd.f32 %v882, %v884
    %s888 = scalar_lea.vmem %s8, 32
    %v889 = vld [vmem:[%s888] sm:$0xff]
    %v890 = vld [vmem:[%s888 + $0x8] sm:$0xff]
    %v891 = vld [vmem:[%s888 + $0x10] sm:$0xff]
    %v892 = vld [vmem:[%s888 + $0x18] sm:$0xff]
    %s893 = scalar_lea.vmem %s9, 1
    %v894 = vld [vmem:[%s893] sm:$0x1]
    %v896 = vperm.slane %v894, 0
    %v899 = vsel %vm195, %v886, 0
    %v902 = vsel %vm195, %v887, 0
    %904 = vmatpush.msra.mxu0 0.0
    %905 = vmatpush.msra.mxu0 0.0
    %906 = vmatpush.msra.mxu0 0.0
    %907 = vmatpush.msra.mxu0 0.0
    %908 = vmatpush.msra.mxu0 0.0
    %909 = vmatpush.msra.mxu0 0.0
    %910 = vmatpush.msra.mxu0 0.0
    %911 = vmatpush.msra.mxu0 0.0
    %912 = vmatpush.msra.mxu0 0.0
    %913 = vmatpush.msra.mxu0 0.0
    %914 = vmatpush.msra.mxu0 0.0
    %915 = vmatpush.msra.mxu0 0.0
    %916 = vmatpush.msra.mxu0 %v892
    %917 = vmatpush.msra.mxu0 %v891
    %918 = vmatpush.msra.mxu0 %v890
    %919 = vmatpush.msra.mxu0 %v889
    %920 = vmatmul.f32.gmra.mxu0 %v899
    %v921 = vpop.f32.mrf.mxu0
    %v922 = vadd.f32 %v896, %v921
    %923 = vmatmul.f32.gmra.mxu0 %v902
    %v924 = vpop.f32.mrf.mxu0
    %v925 = vadd.f32 %v896, %v924
    %926 = vdwg.mxu0
    %928 = vrot.lane.b32.xlu0 %v922, 96
    %v929 = vpop.permute.xlu0 %928
    %v930 = vsel %vm298, %v922, 0
    %v932 = vsel %vm298, %v929, 0
    %934 = vmatpush.xpose.msra.mxu0 0.0
    %935 = vmatpush.xpose.msra.mxu0 0.0
    %936 = vmatpush.xpose.msra.mxu0 0.0
    %937 = vmatpush.xpose.msra.mxu0 0.0
    %938 = vmatpush.xpose.msra.mxu0 0.0
    %939 = vmatpush.xpose.msra.mxu0 0.0
    %940 = vmatpush.xpose.msra.mxu0 0.0
    %941 = vmatpush.xpose.msra.mxu0 0.0
    %942 = vmatpush.xpose.msra.mxu0 0.0
    %943 = vmatpush.xpose.msra.mxu0 0.0
    %944 = vmatpush.xpose.msra.mxu0 0.0
    %945 = vmatpush.xpose.msra.mxu0 0.0
    %946 = vmatpush.xpose.msra.mxu0 0.0
    %947 = vmatpush.xpose.msra.mxu0 0.0
    %948 = vmatpush.xpose.msra.mxu0 0.0
    %949 = vmatpush.xpose.msra.mxu0 %v932
    %950 = vmatmul.f32.gmra.mxu0 %v930
    %v951 = vpop.f32.mrf.mxu0
    %v952 = vadd.f32 0.0, %v951
    %953 = vdwg.mxu0
    %v954 = vmul.f32 %v952, 0.25
    %v955 = vadd.f32 %v954, %v324
    %v956 = vsel %vm326, %v955, -inf
    %957 = vmax.xlane.f32.xlu0 %v956
    %v958 = vpop.xlane.xlu0 %957
    %v959 = vsub.f32 %v955, %v958
    %v960 = vmul.f32 %v959, 1.442695
    %v961 = vpow.pop %v960
    %v962 = vsel %vm326, %v961, 0.0
    %963 = vadd.xlane.f32.xlu0 %v962
    %v964 = vpop.xlane.xlu0 %963
    %v965 = vrcp.pop %v964
    %v966 = vmul.f32 %v961, %v965
    %967 = vrot.lane.b32.xlu0 %v922, 64
    %v968 = vpop.permute.xlu0 %967
    %v971 = vsel %vm326, %v966, 0
    %973 = vmatpush.msra.mxu0 0.0
    %974 = vmatpush.msra.mxu0 0.0
    %975 = vmatpush.msra.mxu0 0.0
    %976 = vmatpush.msra.mxu0 0.0
    %977 = vmatpush.msra.mxu0 0.0
    %978 = vmatpush.msra.mxu0 0.0
    %979 = vmatpush.msra.mxu0 0.0
    %980 = vmatpush.msra.mxu0 0.0
    %981 = vmatpush.msra.mxu0 0.0
    %982 = vmatpush.msra.mxu0 0.0
    %983 = vmatpush.msra.mxu0 0.0
    %984 = vmatpush.msra.mxu0 0.0
    %985 = vmatpush.msra.mxu0 0.0
    %986 = vmatpush.msra.mxu0 0.0
    %987 = vmatpush.msra.mxu0 0.0
    %988 = vmatpush.msra.mxu0 %v968
    %989 = vmatmul.f32.gmra.mxu0 %v971
    %v990 = vpop.f32.mrf.mxu0
    %v991 = vadd.f32 0.0, %v990
    %992 = vdwg.mxu0
    %993 = vrot.lane.b32.xlu0 %v922, 112
    %v994 = vpop.permute.xlu0 %993
    %995 = vrot.lane.b32.xlu0 %v922, 80
    %v996 = vpop.permute.xlu0 %995
    %v997 = vsel %vm298, %v994, 0
    %v999 = vsel %vm298, %v996, 0
    %1001 = vmatpush.xpose.msra.mxu0 0.0
    %1002 = vmatpush.xpose.msra.mxu0 0.0
    %1003 = vmatpush.xpose.msra.mxu0 0.0
    %1004 = vmatpush.xpose.msra.mxu0 0.0
    %1005 = vmatpush.xpose.msra.mxu0 0.0
    %1006 = vmatpush.xpose.msra.mxu0 0.0
    %1007 = vmatpush.xpose.msra.mxu0 0.0
    %1008 = vmatpush.xpose.msra.mxu0 0.0
    %1009 = vmatpush.xpose.msra.mxu0 0.0
    %1010 = vmatpush.xpose.msra.mxu0 0.0
    %1011 = vmatpush.xpose.msra.mxu0 0.0
    %1012 = vmatpush.xpose.msra.mxu0 0.0
    %1013 = vmatpush.xpose.msra.mxu0 0.0
    %1014 = vmatpush.xpose.msra.mxu0 0.0
    %1015 = vmatpush.xpose.msra.mxu0 0.0
    %1016 = vmatpush.xpose.msra.mxu0 %v999
    %1017 = vmatmul.f32.gmra.mxu0 %v997
    %v1018 = vpop.f32.mrf.mxu0
    %v1019 = vadd.f32 0.0, %v1018
    %1020 = vdwg.mxu0
    %v1021 = vmul.f32 %v1019, 0.25
    %v1022 = vadd.f32 %v1021, %v324
    %v1023 = vsel %vm326, %v1022, -inf
    %1024 = vmax.xlane.f32.xlu0 %v1023
    %v1025 = vpop.xlane.xlu0 %1024
    %v1026 = vsub.f32 %v1022, %v1025
    %v1027 = vmul.f32 %v1026, 1.442695
    %v1028 = vpow.pop %v1027
    %v1029 = vsel %vm326, %v1028, 0.0
    %1030 = vadd.xlane.f32.xlu0 %v1029
    %v1031 = vpop.xlane.xlu0 %1030
    %v1032 = vrcp.pop %v1031
    %v1033 = vmul.f32 %v1028, %v1032
    %1034 = vrot.lane.b32.xlu0 %v922, 48
    %v1035 = vpop.permute.xlu0 %1034
    %v1038 = vsel %vm326, %v1033, 0
    %1040 = vmatpush.msra.mxu0 0.0
    %1041 = vmatpush.msra.mxu0 0.0
    %1042 = vmatpush.msra.mxu0 0.0
    %1043 = vmatpush.msra.mxu0 0.0
    %1044 = vmatpush.msra.mxu0 0.0
    %1045 = vmatpush.msra.mxu0 0.0
    %1046 = vmatpush.msra.mxu0 0.0
    %1047 = vmatpush.msra.mxu0 0.0
    %1048 = vmatpush.msra.mxu0 0.0
    %1049 = vmatpush.msra.mxu0 0.0
    %1050 = vmatpush.msra.mxu0 0.0
    %1051 = vmatpush.msra.mxu0 0.0
    %1052 = vmatpush.msra.mxu0 0.0
    %1053 = vmatpush.msra.mxu0 0.0
    %1054 = vmatpush.msra.mxu0 0.0
    %1055 = vmatpush.msra.mxu0 %v1035
    %1056 = vmatmul.f32.gmra.mxu0 %v1038
    %v1057 = vpop.f32.mrf.mxu0
    %v1058 = vadd.f32 0.0, %v1057
    %1059 = vdwg.mxu0
    %1061 = vrot.lane.b32.xlu0 %v1058, 16
    %v1062 = vpop.permute.xlu0 %1061
    %v1064 = vsel %vm298, %v991, %v1062
    %1066 = vrot.lane.b32.xlu0 %v925, 96
    %v1067 = vpop.permute.xlu0 %1066
    %v1068 = vsel %vm298, %v925, 0
    %v1070 = vsel %vm298, %v1067, 0
    %1072 = vmatpush.xpose.msra.mxu0 0.0
    %1073 = vmatpush.xpose.msra.mxu0 0.0
    %1074 = vmatpush.xpose.msra.mxu0 0.0
    %1075 = vmatpush.xpose.msra.mxu0 0.0
    %1076 = vmatpush.xpose.msra.mxu0 0.0
    %1077 = vmatpush.xpose.msra.mxu0 0.0
    %1078 = vmatpush.xpose.msra.mxu0 0.0
    %1079 = vmatpush.xpose.msra.mxu0 0.0
    %1080 = vmatpush.xpose.msra.mxu0 0.0
    %1081 = vmatpush.xpose.msra.mxu0 0.0
    %1082 = vmatpush.xpose.msra.mxu0 0.0
    %1083 = vmatpush.xpose.msra.mxu0 0.0
    %1084 = vmatpush.xpose.msra.mxu0 0.0
    %1085 = vmatpush.xpose.msra.mxu0 0.0
    %1086 = vmatpush.xpose.msra.mxu0 0.0
    %1087 = vmatpush.xpose.msra.mxu0 %v1070
    %1088 = vmatmul.f32.gmra.mxu0 %v1068
    %v1089 = vpop.f32.mrf.mxu0
    %v1090 = vadd.f32 0.0, %v1089
    %1091 = vdwg.mxu0
    %v1092 = vmul.f32 %v1090, 0.25
    %v1093 = vadd.f32 %v1092, %v465
    %v1094 = vsel %vm326, %v1093, -inf
    %1095 = vmax.xlane.f32.xlu0 %v1094
    %v1096 = vpop.xlane.xlu0 %1095
    %v1097 = vsub.f32 %v1093, %v1096
    %v1098 = vmul.f32 %v1097, 1.442695
    %v1099 = vpow.pop %v1098
    %v1100 = vsel %vm326, %v1099, 0.0
    %1101 = vadd.xlane.f32.xlu0 %v1100
    %v1102 = vpop.xlane.xlu0 %1101
    %v1103 = vrcp.pop %v1102
    %v1104 = vmul.f32 %v1099, %v1103
    %1105 = vrot.lane.b32.xlu0 %v925, 64
    %v1106 = vpop.permute.xlu0 %1105
    %v1109 = vsel %vm326, %v1104, 0
    %1111 = vmatpush.msra.mxu0 0.0
    %1112 = vmatpush.msra.mxu0 0.0
    %1113 = vmatpush.msra.mxu0 0.0
    %1114 = vmatpush.msra.mxu0 0.0
    %1115 = vmatpush.msra.mxu0 0.0
    %1116 = vmatpush.msra.mxu0 0.0
    %1117 = vmatpush.msra.mxu0 0.0
    %1118 = vmatpush.msra.mxu0 0.0
    %1119 = vmatpush.msra.mxu0 0.0
    %1120 = vmatpush.msra.mxu0 0.0
    %1121 = vmatpush.msra.mxu0 0.0
    %1122 = vmatpush.msra.mxu0 0.0
    %1123 = vmatpush.msra.mxu0 0.0
    %1124 = vmatpush.msra.mxu0 0.0
    %1125 = vmatpush.msra.mxu0 0.0
    %1126 = vmatpush.msra.mxu0 %v1106
    %1127 = vmatmul.f32.gmra.mxu0 %v1109
    %v1128 = vpop.f32.mrf.mxu0
    %v1129 = vadd.f32 0.0, %v1128
    %1130 = vdwg.mxu0
    %1131 = vrot.lane.b32.xlu0 %v925, 112
    %v1132 = vpop.permute.xlu0 %1131
    %1133 = vrot.lane.b32.xlu0 %v925, 80
    %v1134 = vpop.permute.xlu0 %1133
    %v1135 = vsel %vm298, %v1132, 0
    %v1137 = vsel %vm298, %v1134, 0
    %1139 = vmatpush.xpose.msra.mxu0 0.0
    %1140 = vmatpush.xpose.msra.mxu0 0.0
    %1141 = vmatpush.xpose.msra.mxu0 0.0
    %1142 = vmatpush.xpose.msra.mxu0 0.0
    %1143 = vmatpush.xpose.msra.mxu0 0.0
    %1144 = vmatpush.xpose.msra.mxu0 0.0
    %1145 = vmatpush.xpose.msra.mxu0 0.0
    %1146 = vmatpush.xpose.msra.mxu0 0.0
    %1147 = vmatpush.xpose.msra.mxu0 0.0
    %1148 = vmatpush.xpose.msra.mxu0 0.0
    %1149 = vmatpush.xpose.msra.mxu0 0.0
    %1150 = vmatpush.xpose.msra.mxu0 0.0
    %1151 = vmatpush.xpose.msra.mxu0 0.0
    %1152 = vmatpush.xpose.msra.mxu0 0.0
    %1153 = vmatpush.xpose.msra.mxu0 0.0
    %1154 = vmatpush.xpose.msra.mxu0 %v1137
    %1155 = vmatmul.f32.gmra.mxu0 %v1135
    %v1156 = vpop.f32.mrf.mxu0
    %v1157 = vadd.f32 0.0, %v1156
    %1158 = vdwg.mxu0
    %v1159 = vmul.f32 %v1157, 0.25
    %v1160 = vadd.f32 %v1159, %v465
    %v1161 = vsel %vm326, %v1160, -inf
    %1162 = vmax.xlane.f32.xlu0 %v1161
    %v1163 = vpop.xlane.xlu0 %1162
    %v1164 = vsub.f32 %v1160, %v1163
    %v1165 = vmul.f32 %v1164, 1.442695
    %v1166 = vpow.pop %v1165
    %v1167 = vsel %vm326, %v1166, 0.0
    %1168 = vadd.xlane.f32.xlu0 %v1167
    %v1169 = vpop.xlane.xlu0 %1168
    %v1170 = vrcp.pop %v1169
    %v1171 = vmul.f32 %v1166, %v1170
    %1172 = vrot.lane.b32.xlu0 %v925, 48
    %v1173 = vpop.permute.xlu0 %1172
    %v1176 = vsel %vm326, %v1171, 0
    %1178 = vmatpush.msra.mxu0 0.0
    %1179 = vmatpush.msra.mxu0 0.0
    %1180 = vmatpush.msra.mxu0 0.0
    %1181 = vmatpush.msra.mxu0 0.0
    %1182 = vmatpush.msra.mxu0 0.0
    %1183 = vmatpush.msra.mxu0 0.0
    %1184 = vmatpush.msra.mxu0 0.0
    %1185 = vmatpush.msra.mxu0 0.0
    %1186 = vmatpush.msra.mxu0 0.0
    %1187 = vmatpush.msra.mxu0 0.0
    %1188 = vmatpush.msra.mxu0 0.0
    %1189 = vmatpush.msra.mxu0 0.0
    %1190 = vmatpush.msra.mxu0 0.0
    %1191 = vmatpush.msra.mxu0 0.0
    %1192 = vmatpush.msra.mxu0 0.0
    %1193 = vmatpush.msra.mxu0 %v1173
    %1194 = vmatmul.f32.gmra.mxu0 %v1176
    %v1195 = vpop.f32.mrf.mxu0
    %v1196 = vadd.f32 0.0, %v1195
    %1197 = vdwg.mxu0
    %1199 = vrot.lane.b32.xlu0 %v1196, 16
    %v1200 = vpop.permute.xlu0 %1199
    %v1202 = vsel %vm298, %v1129, %v1200
    %s1203 = scalar_lea.vmem %s10, 32
    %v1204 = vld [vmem:[%s1203] sm:$0xff]
    %v1205 = vld [vmem:[%s1203 + $0x8] sm:$0xff]
    %v1206 = vld [vmem:[%s1203 + $0x10] sm:$0xff]
    %v1207 = vld [vmem:[%s1203 + $0x18] sm:$0xff]
    %s1208 = scalar_lea.vmem %s11, 1
    %v1209 = vld [vmem:[%s1208] sm:$0x1]
    %v1211 = vperm.slane %v1209, 0
    %v1214 = vsel %vm195, %v1064, 0
    %v1217 = vsel %vm195, %v1202, 0
    %1219 = vmatpush.msra.mxu0 0.0
    %1220 = vmatpush.msra.mxu0 0.0
    %1221 = vmatpush.msra.mxu0 0.0
    %1222 = vmatpush.msra.mxu0 0.0
    %1223 = vmatpush.msra.mxu0 0.0
    %1224 = vmatpush.msra.mxu0 0.0
    %1225 = vmatpush.msra.mxu0 0.0
    %1226 = vmatpush.msra.mxu0 0.0
    %1227 = vmatpush.msra.mxu0 0.0
    %1228 = vmatpush.msra.mxu0 0.0
    %1229 = vmatpush.msra.mxu0 0.0
    %1230 = vmatpush.msra.mxu0 0.0
    %1231 = vmatpush.msra.mxu0 %v1207
    %1232 = vmatpush.msra.mxu0 %v1206
    %1233 = vmatpush.msra.mxu0 %v1205
    %1234 = vmatpush.msra.mxu0 %v1204
    %1235 = vmatmul.f32.gmra.mxu0 %v1214
    %v1236 = vpop.f32.mrf.mxu0
    %v1237 = vadd.f32 %v1211, %v1236
    %1238 = vmatmul.f32.gmra.mxu0 %v1217
    %v1239 = vpop.f32.mrf.mxu0
    %v1240 = vadd.f32 %v1211, %v1239
    %1241 = vdwg.mxu0
    %v1242 = vadd.f32 %v886, %v1237
    %v1243 = vadd.f32 %v887, %v1240
    %s1244 = scalar_lea.vmem %s12, 1
    %v1245 = vld [vmem:[%s1244] sm:$0x1]
    %s1246 = scalar_lea.vmem %s13, 1
    %v1247 = vld [vmem:[%s1246] sm:$0x1]
    %v1248 = vsel %vm195, %v1242, 0.0
    %1249 = vadd.xlane.f32.xlu0 %v1248
    %v1250 = vpop.xlane.xlu0 %1249
    %v1251 = vsel %vm195, %v1243, 0.0
    %1252 = vadd.xlane.f32.xlu0 %v1251
    %v1253 = vpop.xlane.xlu0 %1252
    %v1254 = vmul.f32 %v1250, %v208
    %v1255 = vmul.f32 %v1253, %v208
    %v1256 = vsub.f32 %v1242, %v1254
    %v1257 = vsub.f32 %v1243, %v1255
    %v1258 = vmul.f32 %v1256, %v1256
    %v1259 = vmul.f32 %v1257, %v1257
    %v1260 = vsel %vm195, %v1258, 0.0
    %1261 = vadd.xlane.f32.xlu0 %v1260
    %v1262 = vpop.xlane.xlu0 %1261
    %v1263 = vsel %vm195, %v1259, 0.0
    %1264 = vadd.xlane.f32.xlu0 %v1263
    %v1265 = vpop.xlane.xlu0 %1264
    %v1266 = vmul.f32 %v1262, %v208
    %v1267 = vmul.f32 %v1265, %v208
    %v1268 = vadd.f32 %v1266, 1e-12
    %v1269 = vadd.f32 %v1267, 1e-12
    %v1270 = vrsqrt.pop %v1268
    %v1271 = vmul.f32 %v1270, %v1268
    %v1272 = vmul.f32 %v1271, %v1270
    %v1273 = vmul.f32 0.5, %v1272
    %v1274 = vsub.f32 1.5, %v1273
    %v1275 = vmul.f32 %v1270, %v1274
    %vm1276 = vweird.f32 %v1268
    %vm1277 = vweird.f32 %v1270
    %vm1278 = vmor %vm1276, %vm1277
    %v1279 = vsel %vm1278, %v1270, %v1275
    %v1280 = vrsqrt.pop %v1269
    %v1281 = vmul.f32 %v1280, %v1269
    %v1282 = vmul.f32 %v1281, %v1280
    %v1283 = vmul.f32 0.5, %v1282
    %v1284 = vsub.f32 1.5, %v1283
    %v1285 = vmul.f32 %v1280, %v1284
    %vm1286 = vweird.f32 %v1269
    %vm1287 = vweird.f32 %v1280
    %vm1288 = vmor %vm1286, %vm1287
    %v1289 = vsel %vm1288, %v1280, %v1285
    %v1290 = vmul.f32 %v1256, %v1279
    %v1291 = vmul.f32 %v1257, %v1289
    %v1293 = vperm.slane %v1245, 0
    %v1295 = vmul.f32 %v1290, %v1293
    %v1296 = vmul.f32 %v1291, %v1293
    %v1298 = vperm.slane %v1247, 0
    %v1300 = vadd.f32 %v1295, %v1298
    %v1301 = vadd.f32 %v1296, %v1298
    %s1302 = scalar_lea.vmem %s14, 32
    %v1303 = vld [vmem:[%s1302] sm:$0xff]
    %v1304 = vld [vmem:[%s1302 + $0x8] sm:$0xff]
    %v1305 = vld [vmem:[%s1302 + $0x10] sm:$0xff]
    %v1306 = vld [vmem:[%s1302 + $0x18] sm:$0xff]
    %s1307 = scalar_lea.vmem %s15, 1
    %v1308 = vld [vmem:[%s1307] sm:$0x1]
    %v1310 = vperm.slane %v1308, 0
    %v1313 = vsel %vm195, %v1300, 0
    %v1316 = vsel %vm195, %v1301, 0
    %1318 = vmatpush.msra.mxu0 0.0
    %1319 = vmatpush.msra.mxu0 0.0
    %1320 = vmatpush.msra.mxu0 0.0
    %1321 = vmatpush.msra.mxu0 0.0
    %1322 = vmatpush.msra.mxu0 0.0
    %1323 = vmatpush.msra.mxu0 0.0
    %1324 = vmatpush.msra.mxu0 0.0
    %1325 = vmatpush.msra.mxu0 0.0
    %1326 = vmatpush.msra.mxu0 0.0
    %1327 = vmatpush.msra.mxu0 0.0
    %1328 = vmatpush.msra.mxu0 0.0
    %1329 = vmatpush.msra.mxu0 0.0
    %1330 = vmatpush.msra.mxu0 %v1306
    %1331 = vmatpush.msra.mxu0 %v1305
    %1332 = vmatpush.msra.mxu0 %v1304
    %1333 = vmatpush.msra.mxu0 %v1303
    %1334 = vmatmul.f32.gmra.mxu0 %v1313
    %v1335 = vpop.f32.mrf.mxu0
    %v1336 = vadd.f32 %v1310, %v1335
    %1337 = vmatmul.f32.gmra.mxu0 %v1316
    %v1338 = vpop.f32.mrf.mxu0
    %v1339 = vadd.f32 %v1310, %v1338
    %1340 = vdwg.mxu0
    %v1341 = vmul.f32 %v1336, 0.5
    %v1342 = vmul.f32 %v1339, 0.5
    %v1343 = vmul.f32 %v1336, 0.70710677
    %v1344 = vmul.f32 %v1339, 0.70710677
    %v1345 = vand.u32 2147483647, %v1343
    %v1346 = vand.u32 2147483647, %v1344
    %v1347 = vmul.f32 %v1345, 0.3275911
    %v1348 = vmul.f32 %v1346, 0.3275911
    %v1349 = vadd.f32 %v1347, 1.0
    %v1350 = vadd.f32 %v1348, 1.0
    %v1351 = vrcp.pop %v1349
    %v1352 = vmul.f32 %v1349, %v1351
    %v1353 = vsub.f32 1.0, %v1352
    %v1354 = vmul.f32 %v1351, %v1353
    %v1355 = vadd.f32 %v1351, %v1354
    %vm1356 = vweird.f32 %v1349
    %vm1357 = vweird.f32 %v1351
    %vm1358 = vmor %vm1356, %vm1357
    %v1359 = vsel %vm1358, %v1351, %v1355
    %v1360 = vand.u32 2147483647, %v1349
    %vm1361 = vcmp.eq.f32.partialorder %v1360, 8.507059e+37
    %v1362 = vand.u32 %v1349, 2147483648
    %v1363 = vor.u32 1.1754944e-38, %v1362
    %v1364 = vsel %vm1361, %v1363, %v1359
    %v1365 = vmul.f32 1.0, %v1364
    %v1366 = vrcp.pop %v1350
    %v1367 = vmul.f32 %v1350, %v1366
    %v1368 = vsub.f32 1.0, %v1367
    %v1369 = vmul.f32 %v1366, %v1368
    %v1370 = vadd.f32 %v1366, %v1369
    %vm1371 = vweird.f32 %v1350
    %vm1372 = vweird.f32 %v1366
    %vm1373 = vmor %vm1371, %vm1372
    %v1374 = vsel %vm1373, %v1366, %v1370
    %v1375 = vand.u32 2147483647, %v1350
    %vm1376 = vcmp.eq.f32.partialorder %v1375, 8.507059e+37
    %v1377 = vand.u32 %v1350, 2147483648
    %v1378 = vor.u32 1.1754944e-38, %v1377
    %v1379 = vsel %vm1376, %v1378, %v1374
    %v1380 = vmul.f32 1.0, %v1379
    %v1381 = vmul.f32 %v1365, 1.0614054
    %v1382 = vmul.f32 %v1380, 1.0614054
    %v1383 = vadd.f32 %v1381, -1.4531521
    %v1384 = vadd.f32 %v1382, -1.4531521
    %v1385 = vmul.f32 %v1383, %v1365
    %v1386 = vmul.f32 %v1384, %v1380
    %v1387 = vadd.f32 %v1385, 1.4214138
    %v1388 = vadd.f32 %v1386, 1.4214138
    %v1389 = vmul.f32 %v1387, %v1365
    %v1390 = vmul.f32 %v1388, %v1380
    %v1391 = vadd.f32 %v1389, -0.28449672
    %v1392 = vadd.f32 %v1390, -0.28449672
    %v1393 = vmul.f32 %v1391, %v1365
    %v1394 = vmul.f32 %v1392, %v1380
    %v1395 = vadd.f32 %v1393, 0.2548296
    %v1396 = vadd.f32 %v1394, 0.2548296
    %v1397 = vmul.f32 %v1395, %v1365
    %v1398 = vmul.f32 %v1396, %v1380
    %v1399 = vsub.f32 0.0, %v1345
    %v1400 = vsub.f32 0.0, %v1346
    %v1401 = vmul.f32 %v1399, %v1345
    %v1402 = vmul.f32 %v1400, %v1346
    %v1403 = vmul.f32 %v1401, 1.442695
    %v1404 = vpow.pop %v1403
    %v1405 = vmul.f32 %v1402, 1.442695
    %v1406 = vpow.pop %v1405
    %v1407 = vmul.f32 %v1397, %v1404
    %v1408 = vmul.f32 %v1398, %v1406
    %v1409 = vsub.f32 1.0, %v1407
    %v1410 = vsub.f32 1.0, %v1408
    %vm1411 = vcmp.ge.f32.partialorder %v1343, 0.0
    %vm1412 = vcmp.ge.f32.partialorder %v1344, 0.0
    %v1413 = vsub.f32 0.0, %v1409
    %v1414 = vsub.f32 0.0, %v1410
    %v1415 = vsel %vm1411, %v1409, %v1413
    %v1416 = vsel %vm1412, %v1410, %v1414
    %v1417 = vadd.f32 %v1415, 1.0
    %v1418 = vadd.f32 %v1416, 1.0
    %v1419 = vmul.f32 %v1341, %v1417
    %v1420 = vmul.f32 %v1342, %v1418
    %s1421 = scalar_lea.vmem %s16, 64
    %v1422 = vld [vmem:[%s1421] sm:$0xff]
    %v1423 = vld [vmem:[%s1421 + $0x8] sm:$0xff]
    %v1424 = vld [vmem:[%s1421 + $0x10] sm:$0xff]
    %v1425 = vld [vmem:[%s1421 + $0x18] sm:$0xff]
    %v1426 = vld [vmem:[%s1421 + $0x20] sm:$0xff]
    %v1427 = vld [vmem:[%s1421 + $0x28] sm:$0xff]
    %v1428 = vld [vmem:[%s1421 + $0x30] sm:$0xff]
    %v1429 = vld [vmem:[%s1421 + $0x38] sm:$0xff]
    %s1430 = scalar_lea.vmem %s17, 1
    %v1431 = vld [vmem:[%s1430] sm:$0x1]
    %v1433 = vperm.slane %v1431, 0
    %v1436 = vsel %vm800, %v1419, 0
    %v1439 = vsel %vm800, %v1420, 0
    %1441 = vmatpush.msra.mxu0 0.0
    %1442 = vmatpush.msra.mxu0 0.0
    %1443 = vmatpush.msra.mxu0 0.0
    %1444 = vmatpush.msra.mxu0 0.0
    %1445 = vmatpush.msra.mxu0 0.0
    %1446 = vmatpush.msra.mxu0 0.0
    %1447 = vmatpush.msra.mxu0 0.0
    %1448 = vmatpush.msra.mxu0 0.0
    %1449 = vmatpush.msra.mxu0 %v1429
    %1450 = vmatpush.msra.mxu0 %v1428
    %1451 = vmatpush.msra.mxu0 %v1427
    %1452 = vmatpush.msra.mxu0 %v1426
    %1453 = vmatpush.msra.mxu0 %v1425
    %1454 = vmatpush.msra.mxu0 %v1424
    %1455 = vmatpush.msra.mxu0 %v1423
    %1456 = vmatpush.msra.mxu0 %v1422
    %1457 = vmatmul.f32.gmra.mxu0 %v1436
    %v1458 = vpop.f32.mrf.mxu0
    %v1459 = vadd.f32 %v1433, %v1458
    %1460 = vmatmul.f32.gmra.mxu0 %v1439
    %v1461 = vpop.f32.mrf.mxu0
    %v1462 = vadd.f32 %v1433, %v1461
    %1463 = vdwg.mxu0
    %v1464 = vadd.f32 %v1300, %v1459
    %v1465 = vadd.f32 %v1301, %v1462
    %s1466 = scalar_lea.vmem %s18, 1
    %v1467 = vld [vmem:[%s1466] sm:$0x1]
    %s1468 = scalar_lea.vmem %s19, 1
    %v1469 = vld [vmem:[%s1468] sm:$0x1]
    %v1470 = vsel %vm195, %v1464, 0.0
    %1471 = vadd.xlane.f32.xlu0 %v1470
    %v1472 = vpop.xlane.xlu0 %1471
    %v1473 = vsel %vm195, %v1465, 0.0
    %1474 = vadd.xlane.f32.xlu0 %v1473
    %v1475 = vpop.xlane.xlu0 %1474
    %v1476 = vmul.f32 %v1472, %v208
    %v1477 = vmul.f32 %v1475, %v208
    %v1478 = vsub.f32 %v1464, %v1476
    %v1479 = vsub.f32 %v1465, %v1477
    %v1480 = vmul.f32 %v1478, %v1478
    %v1481 = vmul.f32 %v1479, %v1479
    %v1482 = vsel %vm195, %v1480, 0.0
    %1483 = vadd.xlane.f32.xlu0 %v1482
    %v1484 = vpop.xlane.xlu0 %1483
    %v1485 = vsel %vm195, %v1481, 0.0
    %1486 = vadd.xlane.f32.xlu0 %v1485
    %v1487 = vpop.xlane.xlu0 %1486
    %v1488 = vmul.f32 %v1484, %v208
    %v1489 = vmul.f32 %v1487, %v208
    %v1490 = vadd.f32 %v1488, 1e-12
    %v1491 = vadd.f32 %v1489, 1e-12
    %v1492 = vrsqrt.pop %v1490
    %v1493 = vmul.f32 %v1492, %v1490
    %v1494 = vmul.f32 %v1493, %v1492
    %v1495 = vmul.f32 0.5, %v1494
    %v1496 = vsub.f32 1.5, %v1495
    %v1497 = vmul.f32 %v1492, %v1496
    %vm1498 = vweird.f32 %v1490
    %vm1499 = vweird.f32 %v1492
    %vm1500 = vmor %vm1498, %vm1499
    %v1501 = vsel %vm1500, %v1492, %v1497
    %v1502 = vrsqrt.pop %v1491
    %v1503 = vmul.f32 %v1502, %v1491
    %v1504 = vmul.f32 %v1503, %v1502
    %v1505 = vmul.f32 0.5, %v1504
    %v1506 = vsub.f32 1.5, %v1505
    %v1507 = vmul.f32 %v1502, %v1506
    %vm1508 = vweird.f32 %v1491
    %vm1509 = vweird.f32 %v1502
    %vm1510 = vmor %vm1508, %vm1509
    %v1511 = vsel %vm1510, %v1502, %v1507
    %v1512 = vmul.f32 %v1478, %v1501
    %v1513 = vmul.f32 %v1479, %v1511
    %v1515 = vperm.slane %v1467, 0
    %v1517 = vmul.f32 %v1512, %v1515
    %v1518 = vmul.f32 %v1513, %v1515
    %v1520 = vperm.slane %v1469, 0
    %v1522 = vadd.f32 %v1517, %v1520
    %v1523 = vadd.f32 %v1518, %v1520
    %v1525 = vrot.slane %v1523, 7
    %vm1527 = vcmask 1040384
    %v1528 = vsel %vm1527, %v1522, %v1525
    %v1529 = vld [vmem:[%s20] sm:$0xff]
    %v1530 = vld [vmem:[%s20 + $0x8] sm:$0xff]
    %v1531 = vld [vmem:[%s20 + $0x10] sm:$0xff]
    %v1532 = vld [vmem:[%s20 + $0x18] sm:$0xff]
    %v1533 = vld [vmem:[%s21] sm:$0x1]
    %v1535 = vperm.slane %v1533, 0
    %v1538 = vsel %vm195, %v1528, 0
    %1540 = vmatpush.msra.mxu0 0.0
    %1541 = vmatpush.msra.mxu0 0.0
    %1542 = vmatpush.msra.mxu0 0.0
    %1543 = vmatpush.msra.mxu0 0.0
    %1544 = vmatpush.msra.mxu0 0.0
    %1545 = vmatpush.msra.mxu0 0.0
    %1546 = vmatpush.msra.mxu0 0.0
    %1547 = vmatpush.msra.mxu0 0.0
    %1548 = vmatpush.msra.mxu0 0.0
    %1549 = vmatpush.msra.mxu0 0.0
    %1550 = vmatpush.msra.mxu0 0.0
    %1551 = vmatpush.msra.mxu0 0.0
    %1552 = vmatpush.msra.mxu0 %v1532
    %1553 = vmatpush.msra.mxu0 %v1531
    %1554 = vmatpush.msra.mxu0 %v1530
    %1555 = vmatpush.msra.mxu0 %v1529
    %1556 = vmatmul.f32.gmra.mxu0 %v1538
    %v1557 = vpop.f32.mrf.mxu0
    %v1558 = vadd.f32 %v1535, %v1557
    %1559 = vdwg.mxu0
    %v1560 = vtanh.pop %v1558
    %v1561 = vld [vmem:[%s22] sm:$0xff]
    %v1562 = vld [vmem:[%s22 + $0x8] sm:$0xff]
    %v1563 = vld [vmem:[%s22 + $0x10] sm:$0xff]
    %v1564 = vld [vmem:[%s22 + $0x18] sm:$0xff]
    %v1565 = vld [vmem:[%s23] sm:$0x1]
    %v1567 = vperm.slane %v1565, 0
    %v1570 = vsel %vm195, %v1560, 0
    %1572 = vmatpush.msra.mxu0 0.0
    %1573 = vmatpush.msra.mxu0 0.0
    %1574 = vmatpush.msra.mxu0 0.0
    %1575 = vmatpush.msra.mxu0 0.0
    %1576 = vmatpush.msra.mxu0 0.0
    %1577 = vmatpush.msra.mxu0 0.0
    %1578 = vmatpush.msra.mxu0 0.0
    %1579 = vmatpush.msra.mxu0 0.0
    %1580 = vmatpush.msra.mxu0 0.0
    %1581 = vmatpush.msra.mxu0 0.0
    %1582 = vmatpush.msra.mxu0 0.0
    %1583 = vmatpush.msra.mxu0 0.0
    %1584 = vmatpush.msra.mxu0 %v1564
    %1585 = vmatpush.msra.mxu0 %v1563
    %1586 = vmatpush.msra.mxu0 %v1562
    %1587 = vmatpush.msra.mxu0 %v1561
    %1588 = vmatmul.f32.gmra.mxu0 %v1570
    %v1589 = vpop.f32.mrf.mxu0
    %v1590 = vadd.f32 %v1567, %v1589
    %1591 = vdwg.mxu0
    %vm1592 = vcmask 17408
    %1593 = vst.msk [vmem:[#allocation2] sm:$0x3] %vm1592, %v1590
    // Predicated region
    $region98: #{bert_classifier_forward.1} parent=1 // pred_check
      _
    $region99: #{bert_classifier_forward.1} parent=1 // pred_check_branch
      %1595 = sbr.rel (0) target = $region101
    $region100: #{bert_classifier_forward.1} parent=1 // pred_region
      %1597 = vsyncadd [#allocation3], 0
      %s1599 = sshll.u32 [#allocation2], 4
      %s1600 = int_to_ptr.vmem [resolvable:$true] %s1599
      %s1601 = sshll.u32 %s24, 4
      %s1602 = int_to_ptr.hbm [resolvable:$true] %s1601
      %1604 = dma.vmem_to_hbm [thread:$0]  %s1600, 32, %s1602, [#allocation3]
    $region101: #{bert_classifier_forward.1} parent=1 // pred_fallthru
      _
    // Predicated region
    $region102: #{bert_classifier_forward.1} parent=1 // pred_check
      _
    $region103: #{bert_classifier_forward.1} parent=1 // pred_check_branch
      %1606 = sbr.rel (0) target = $region105
    $region104: #{bert_classifier_forward.1} parent=1 // pred_region
      %1608 = dma.done [#allocation3], 32
    $region105: #{bert_classifier_forward.1} parent=1 // pred_fallthru
      _
    %1609 = vsyncpa [#allocation3], 1

</llo_original>
